<compile_context>
chip_gen: v5e
topology: v5e:2x2
jax: 0.10.0
libtpu: 0.0.40
codegen_flags: <defaults>
</compile_context>

<pallas_src>
import functools

import jax
import jax.numpy as jnp
from jax.experimental import pallas as pl
from jax.experimental.pallas import tpu as pltpu

EPS = 1e-5  # GroupNorm eps (PyTorch default)


def _mish_ref(v):
    """Canonical Mish: x * tanh(softplus(x)) (wrapper / reference only)."""
    sp = jnp.maximum(v, 0.0) + jnp.log1p(jnp.exp(-jnp.abs(v)))
    return v * jnp.tanh(sp)


def _mish_kernel(v):
    """Mish with a single transcendental:
    tanh(softplus(x)) = ((1+e^x)^2 - 1) / ((1+e^x)^2 + 1), evaluated stably via e^{-|x|}."""
    e = jnp.exp(-jnp.abs(v))
    w = e * (e + 2.0)
    pos = v >= 0.0
    num = jnp.where(pos, 1.0 + 2.0 * e, w)
    den = jnp.where(pos, num + 2.0 * e * e, w + 2.0)
    return v * num * pl.reciprocal(den, approx=True)


def _rtb_kernel(K, pad, H, Hp, Bt, C_in,
                xcol_ref, temb_ref,
                w1_ref, b1_ref, g1_ref, be1_ref, gavg_ref,
                w2_ref, b2_ref, g2_ref, be2_ref,
                wr_ref, br_ref,
                out_ref, h_ref):
    N = Bt * Hp                       # packed lane width of this block
    C = w1_ref.shape[0]               # out_channels

    # validity mask for one padded horizon segment: 1 on the H interior columns, 0 on pads
    col = jax.lax.broadcasted_iota(jnp.int32, (1, Hp), 1)
    mask = jnp.logical_and(col >= pad, col < pad + H).astype(jnp.float32)

    gavg = gavg_ref[...]              # block-diagonal group-average (includes 1/(gs*H))
    gamma1, beta1 = g1_ref[...], be1_ref[...]
    gamma2, beta2 = g2_ref[...], be2_ref[...]

    def gn_scale_shift(seg):
        # per-(batch, group) statistics over the H valid columns (pad columns masked to 0); f32
        segm = seg * mask
        s1 = jnp.sum(segm, axis=-1, keepdims=True)                   # [C, 1] sum
        s2 = jnp.sum(segm * segm, axis=-1, keepdims=True)            # [C, 1] sum of squares
        gm = jnp.dot(gavg, s1, preferred_element_type=jnp.float32)   # group mean (per channel)
        gm2 = jnp.dot(gavg, s2, preferred_element_type=jnp.float32)  # group E[x^2]
        return gm, gm2 - gm * gm                                     # mean, biased variance

    # ---- Conv1dBlock #0: single im2col matmul over the whole slab (bf16 -> f32 acc) --------
    y1 = jnp.dot(w1_ref[...], xcol_ref[...],
                 preferred_element_type=jnp.float32) + b1_ref[...]    # [C, N] f32

    # zero only the 2*pad halo columns of the conv-#1 scratch (interior is fully rewritten)
    if pad:
        h_ref[:, :pad] = jnp.zeros((C, pad), jnp.bfloat16)
        h_ref[:, N + pad:] = jnp.zeros((C, pad), jnp.bfloat16)

    # per-batch GroupNorm + Mish + time embedding; padded h slab stored in bf16 for conv #1
    for b in range(Bt):
        lo = b * Hp
        seg = y1[:, lo:lo + Hp]                                       # [C, Hp] static slice
        gm, var = gn_scale_shift(seg)
        scale = gamma1 * jax.lax.rsqrt(var + EPS)
        shift = beta1 - gm * scale
        h_seg = _mish_kernel(seg * scale + shift) + temb_ref[:, lo:lo + Hp]
        h_ref[:, pad + lo:pad + lo + Hp] = (h_seg * mask).astype(jnp.bfloat16)

    # ---- Conv1dBlock #1: im2col from the padded slab, single matmul -------------------------
    hcol = jnp.concatenate([h_ref[:, k:k + N] for k in range(K)], axis=0)   # [K*C, N] bf16
    y2 = jnp.dot(w2_ref[...], hcol,
                 preferred_element_type=jnp.float32) + b2_ref[...]    # [C, N] f32

    # ---- residual 1x1 conv over the whole slab (the k == pad tap of xcol is x itself) -------
    x_slab = xcol_ref[pad * C_in:(pad + 1) * C_in, :]                 # [C_in, N] bf16
    res = jnp.dot(wr_ref[...], x_slab,
                  preferred_element_type=jnp.float32) + br_ref[...]   # [C, N] f32

    # per-batch GroupNorm + Mish + residual, lane-dense slab output
    for b in range(Bt):
        lo = b * Hp
        seg = y2[:, lo:lo + Hp]
        gm, var = gn_scale_shift(seg)
        scale = gamma2 * jax.lax.rsqrt(var + EPS)
        shift = beta2 - gm * scale
        out_ref[:, lo:lo + Hp] = _mish_kernel(seg * scale + shift) + res[:, lo:lo + Hp]


def _pick_batch_tile(B, Hp, C_out, C_in, K):
    """Largest batch tile whose working slabs stay within a modest VMEM budget.

    A tile that does not cover the whole batch must keep the packed lane width (Bt * Hp) a
    multiple of 128 (Pallas minor-dim block constraint)."""
    bytes_per_col = 4 * 3 * C_out + 2 * (K * C_out + K * C_in + C_out)   # f32 y1/y2/out + bf16 slabs
    budget = 1 << 20
    legal = [bt for bt in range(1, B + 1)
             if B % bt == 0 and (bt == B or (bt * Hp) % 128 == 0)]
    fitting = [bt for bt in legal if bt * Hp * bytes_per_col <= budget]
    return max(fitting) if fitting else min(legal)


def residual_temporal_block(x, t, params, *, kernel_size=5, n_groups=8):
    """x: [B, C_in, H], t: [B, E] -> [B, C_out, H] (residual path is a 1x1 conv, C_in != C_out)."""
    B, C_in, H = x.shape
    C_out = params["w1"].shape[0]
    K = kernel_size
    pad = (K - 1) // 2
    Hp = H + 2 * pad
    gs = C_out // n_groups
    f32, bf16 = jnp.float32, jnp.bfloat16

    # ---- wrapper-side layout plumbing (cheap XLA glue) --------------------------------------
    xpad = jnp.pad(x.astype(f32), ((0, 0), (0, 0), (pad, pad)))            # [B, C_in, Hp]
    # im2col for conv #0: tap k at padded column j reads xpad[:, :, j + k - pad]
    xpad2 = jnp.pad(xpad, ((0, 0), (0, 0), (pad, pad)))                    # [B, C_in, Hp + 2*pad]
    xcol = jnp.concatenate([xpad2[:, :, k:k + Hp] for k in range(K)], axis=1)   # [B, K*C_in, Hp]
    xcol = xcol.transpose(1, 0, 2).reshape(K * C_in, B * Hp).astype(bf16)

    # tiny time MLP precomputed once and pre-broadcast to the slab layout
    temb = _mish_ref(t.astype(f32)) @ params["time_w"].astype(f32).T + params["time_b"].astype(f32)
    temb_slab = jnp.broadcast_to(temb.T[:, :, None], (C_out, B, Hp)).reshape(C_out, B * Hp)

    # conv weights flattened for im2col: w_flat[o, k*C_in + c] = W[o, c, k]
    w1_flat = jnp.transpose(params["w1"], (0, 2, 1)).reshape(C_out, K * C_in).astype(bf16)
    w2_flat = jnp.transpose(params["w2"], (0, 2, 1)).reshape(C_out, K * C_out).astype(bf16)
    wr = params["res_w"].astype(bf16)

    col = lambda v: v.reshape(-1, 1).astype(f32)
    b1, g1, be1 = col(params["b1"]), col(params["gn1_w"]), col(params["gn1_b"])
    b2, g2, be2 = col(params["b2"]), col(params["gn2_w"]), col(params["gn2_b"])
    br = col(params["res_b"])

    # block-diagonal group-averaging matrix (folds in the 1/(group_size * H) normalisation)
    gids = jnp.arange(C_out) // gs
    gavg = (gids[:, None] == gids[None, :]).astype(f32) / float(gs * H)

    Bt = _pick_batch_tile(B, Hp, C_out, C_in, K)
    Nb = Bt * Hp

    def const_spec(shape):
        nd = len(shape)
        return pl.BlockSpec(shape, lambda i, _nd=nd: (0,) * _nd)

    kernel = functools.partial(_rtb_kernel, K, pad, H, Hp, Bt, C_in)
    out_slab = pl.pallas_call(
        kernel,
        out_shape=jax.ShapeDtypeStruct((C_out, B * Hp), f32),
        grid_spec=pltpu.PrefetchScalarGridSpec(
            num_scalar_prefetch=0,
            grid=(B // Bt,),
            in_specs=[
                pl.BlockSpec((K * C_in, Nb), lambda i: (0, i)),      # im2col of x
                pl.BlockSpec((C_out, Nb), lambda i: (0, i)),         # time-embedding slab
                const_spec(w1_flat.shape), const_spec(b1.shape),
                const_spec(g1.shape), const_spec(be1.shape),
                const_spec(gavg.shape),
                const_spec(w2_flat.shape), const_spec(b2.shape),
                const_spec(g2.shape), const_spec(be2.shape),
                const_spec(wr.shape), const_spec(br.shape),
            ],
            out_specs=pl.BlockSpec((C_out, Nb), lambda i: (0, i)),
            scratch_shapes=[pltpu.VMEM((C_out, Nb + 2 * pad), bf16)],
        ),
        compiler_params=pltpu.CompilerParams(
            dimension_semantics=("parallel",)),   # batch blocks are independent (2 TCs on v7x)
    )(xcol, temb_slab, w1_flat, b1, g1, be1, gavg, w2_flat, b2, g2, be2, wr, br)

    # drop the per-batch horizon padding and restore [B, C_out, H]
    return out_slab.reshape(C_out, B, Hp)[:, :, pad:pad + H].transpose(1, 0, 2)


def init_params(key, C_in, C_out, E, K):
    ks = jax.random.split(key, 8)

    def u(k, shape, fan_in):
        bound = 1.0 / jnp.sqrt(jnp.float32(fan_in))
        return jax.random.uniform(k, shape, jnp.float32, -bound, bound)

    return dict(
        w1=u(ks[0], (C_out, C_in, K), C_in * K),
        b1=u(ks[1], (C_out,), C_in * K),
        gn1_w=jnp.ones((C_out,), jnp.float32),
        gn1_b=jnp.zeros((C_out,), jnp.float32),
        time_w=u(ks[2], (C_out, E), E),
        time_b=u(ks[3], (C_out,), E),
        w2=u(ks[4], (C_out, C_out, K), C_out * K),
        b2=u(ks[5], (C_out,), C_out * K),
        gn2_w=jnp.ones((C_out,), jnp.float32),
        gn2_b=jnp.zeros((C_out,), jnp.float32),
        res_w=u(ks[6], (C_out, C_in), C_in),   # 1x1 conv (inp_channels != out_channels)
        res_b=u(ks[7], (C_out,), C_in),
    )


def reference(x, t, params, *, K=5, n_groups=8):
    """Pure-JAX f32 reference with PyTorch semantics (for verification)."""
    pad = (K - 1) // 2

    def conv1d(xx, w, b):
        y = jax.lax.conv_general_dilated(
            xx, w, window_strides=(1,), padding=[(pad, pad)],
            dimension_numbers=("NCH", "OIH", "NCH"))
        return y + b[None, :, None]

    def gn(h, g, b):
        B, C, H = h.shape
        hg = h.reshape(B, n_groups, -1)
        mu = hg.mean(-1, keepdims=True)
        var = hg.var(-1, keepdims=True)  # biased, as in PyTorch GroupNorm
        hn = ((hg - mu) / jnp.sqrt(var + EPS)).reshape(B, C, H)
        return hn * g[None, :, None] + b[None, :, None]

    h = _mish_ref(gn(conv1d(x, params["w1"], params["b1"]), params["gn1_w"], params["gn1_b"]))
    temb = _mish_ref(t) @ params["time_w"].T + params["time_b"]
    h = h + temb[:, :, None]
    h = _mish_ref(gn(conv1d(h, params["w2"], params["b2"]), params["gn2_w"], params["gn2_b"]))
    res = jnp.einsum("oc,bch->boh", params["res_w"], x) + params["res_b"][None, :, None]
    return h + res


if __name__ == "__main__":
    B, C_in, C_out, E, H, K = 2, 4, 32, 32, 16, 5
    key = jax.random.PRNGKey(0)
    kx, kt, kp = jax.random.split(key, 3)
    x = jax.random.normal(kx, (B, C_in, H), jnp.float32)
    t = jax.random.normal(kt, (B, E), jnp.float32)
    params = init_params(kp, C_in, C_out, E, K)

    out = residual_temporal_block(x, t, params, kernel_size=K)
    out = jax.block_until_ready(out)
    assert out.shape == (B, C_out, H)

    ref = reference(x, t, params, K=K)
    # bf16 MXU operands (f32 accumulation, f32 GroupNorm statistics) -> bf16-level tolerance
    if not jnp.allclose(out, ref, atol=3e-2, rtol=3e-2):
        raise AssertionError(
            f"kernel/reference mismatch, max abs err = {float(jnp.max(jnp.abs(out - ref)))}")

    print("KERNEL_OK")
</pallas_src>

<mosaic_0001>
module attributes {stable_mosaic.version = 11 : i64} {
  func.func @_rtb_kernel(%arg0: i32, %arg1: memref<20x40xbf16, #tpu.memory_space<vmem>>, %arg2: memref<32x40xf32, #tpu.memory_space<vmem>>, %arg3: memref<32x20xbf16, #tpu.memory_space<vmem>>, %arg4: memref<32x1xf32, #tpu.memory_space<vmem>>, %arg5: memref<32x1xf32, #tpu.memory_space<vmem>>, %arg6: memref<32x1xf32, #tpu.memory_space<vmem>>, %arg7: memref<32x32xf32, #tpu.memory_space<vmem>>, %arg8: memref<32x160xbf16, #tpu.memory_space<vmem>>, %arg9: memref<32x1xf32, #tpu.memory_space<vmem>>, %arg10: memref<32x1xf32, #tpu.memory_space<vmem>>, %arg11: memref<32x1xf32, #tpu.memory_space<vmem>>, %arg12: memref<32x4xbf16, #tpu.memory_space<vmem>>, %arg13: memref<32x1xf32, #tpu.memory_space<vmem>>, %arg14: memref<32x40xf32, #tpu.memory_space<vmem>>, %arg15: memref<32x44xbf16, #tpu.memory_space<vmem>>) attributes {dimension_semantics = [#tpu.dimension_semantics<parallel>], iteration_bounds = array<i64: 1>, scalar_prefetch = 0 : i64, scratch_operands = 1 : i64, tpu.core_type = #tpu.core_type<tc>, window_params = [{transform_indices = @transform_0, window_bounds = array<i64: 20, 40>}, {transform_indices = @transform_1, window_bounds = array<i64: 32, 40>}, {pipeline_mode = #tpu.pipeline_mode<synchronous>, transform_indices = @transform_2, window_bounds = array<i64: 32, 20>}, {pipeline_mode = #tpu.pipeline_mode<synchronous>, transform_indices = @transform_3, window_bounds = array<i64: 32, 1>}, {pipeline_mode = #tpu.pipeline_mode<synchronous>, transform_indices = @transform_4, window_bounds = array<i64: 32, 1>}, {pipeline_mode = #tpu.pipeline_mode<synchronous>, transform_indices = @transform_5, window_bounds = array<i64: 32, 1>}, {pipeline_mode = #tpu.pipeline_mode<synchronous>, transform_indices = @transform_6, window_bounds = array<i64: 32, 32>}, {pipeline_mode = #tpu.pipeline_mode<synchronous>, transform_indices = @transform_7, window_bounds = array<i64: 32, 160>}, {pipeline_mode = #tpu.pipeline_mode<synchronous>, transform_indices = @transform_8, window_bounds = array<i64: 32, 1>}, {pipeline_mode = #tpu.pipeline_mode<synchronous>, transform_indices = @transform_9, window_bounds = array<i64: 32, 1>}, {pipeline_mode = #tpu.pipeline_mode<synchronous>, transform_indices = @transform_10, window_bounds = array<i64: 32, 1>}, {pipeline_mode = #tpu.pipeline_mode<synchronous>, transform_indices = @transform_11, window_bounds = array<i64: 32, 4>}, {pipeline_mode = #tpu.pipeline_mode<synchronous>, transform_indices = @transform_12, window_bounds = array<i64: 32, 1>}, {transform_indices = @transform_13, window_bounds = array<i64: 32, 40>}]} {
    %0 = tpu.iota {dimensions = array<i32: 1>} : vector<1x20xi32>
    %c2_i32 = arith.constant 2 : i32
    %1 = vector.broadcast %c2_i32 : i32 to vector<1x20xi32>
    %2 = arith.cmpi sge, %0, %1 : vector<1x20xi32>
    %c18_i32 = arith.constant 18 : i32
    %3 = vector.broadcast %c18_i32 : i32 to vector<1x20xi32>
    %4 = arith.cmpi slt, %0, %3 : vector<1x20xi32>
    %5 = arith.andi %2, %4 : vector<1x20xi1>
    %6 = arith.extui %5 : vector<1x20xi1> to vector<1x20xi32>
    %7 = arith.sitofp %6 : vector<1x20xi32> to vector<1x20xf32>
    %c0 = arith.constant 0 : index
    %c0_0 = arith.constant 0 : index
    %8 = vector.load %arg7[%c0, %c0_0] : memref<32x32xf32, #tpu.memory_space<vmem>>, vector<32x32xf32>
    %c0_1 = arith.constant 0 : index
    %c0_2 = arith.constant 0 : index
    %9 = vector.load %arg5[%c0_1, %c0_2] : memref<32x1xf32, #tpu.memory_space<vmem>>, vector<32x1xf32>
    %c0_3 = arith.constant 0 : index
    %c0_4 = arith.constant 0 : index
    %10 = vector.load %arg6[%c0_3, %c0_4] : memref<32x1xf32, #tpu.memory_space<vmem>>, vector<32x1xf32>
    %c0_5 = arith.constant 0 : index
    %c0_6 = arith.constant 0 : index
    %11 = vector.load %arg10[%c0_5, %c0_6] : memref<32x1xf32, #tpu.memory_space<vmem>>, vector<32x1xf32>
    %c0_7 = arith.constant 0 : index
    %c0_8 = arith.constant 0 : index
    %12 = vector.load %arg11[%c0_7, %c0_8] : memref<32x1xf32, #tpu.memory_space<vmem>>, vector<32x1xf32>
    %c0_9 = arith.constant 0 : index
    %c0_10 = arith.constant 0 : index
    %13 = vector.load %arg3[%c0_9, %c0_10] : memref<32x20xbf16, #tpu.memory_space<vmem>>, vector<32x20xbf16>
    %c0_11 = arith.constant 0 : index
    %c0_12 = arith.constant 0 : index
    %14 = vector.load %arg1[%c0_11, %c0_12] : memref<20x40xbf16, #tpu.memory_space<vmem>>, vector<20x40xbf16>
    %cst = arith.constant dense<0.000000e+00> : vector<32x40xf32>
    %15 = tpu.matmul %13, %14, %cst {dimension_numbers = #tpu.dot_dimension_numbers<[1], [0], [0], [1], [0, 0, 1, 1], [], []>} : vector<32x20xbf16>, vector<20x40xbf16>, vector<32x40xf32> -> vector<32x40xf32>
    %c0_13 = arith.constant 0 : index
    %c0_14 = arith.constant 0 : index
    %16 = vector.load %arg4[%c0_13, %c0_14] : memref<32x1xf32, #tpu.memory_space<vmem>>, vector<32x1xf32>
    %17 = vector.broadcast %16 : vector<32x1xf32> to vector<32x40xf32>
    %18 = arith.addf %15, %17 : vector<32x40xf32>
    %cst_15 = arith.constant 0.000000e+00 : bf16
    %19 = vector.broadcast %cst_15 : bf16 to vector<32x2xbf16>
    %c0_16 = arith.constant 0 : index
    %c0_17 = arith.constant 0 : index
    %20 = vector.load %arg15[%c0_16, %c0_17] : memref<32x44xbf16, #tpu.memory_space<vmem>>, vector<32x2xbf16>
    tpu.vector_store %arg15[%c0_16, %c0_17], %19 {strides = array<i32>} : memref<32x44xbf16, #tpu.memory_space<vmem>>, vector<32x2xbf16>,
    %cst_18 = arith.constant 0.000000e+00 : bf16
    %21 = vector.broadcast %cst_18 : bf16 to vector<32x2xbf16>
    %c0_19 = arith.constant 0 : index
    %c42 = arith.constant 42 : index
    %22 = vector.load %arg15[%c0_19, %c42] : memref<32x44xbf16, #tpu.memory_space<vmem>>, vector<32x2xbf16>
    tpu.vector_store %arg15[%c0_19, %c42], %21 {strides = array<i32>} : memref<32x44xbf16, #tpu.memory_space<vmem>>, vector<32x2xbf16>,
    %23 = vector.extract_strided_slice %18 {offsets = [0, 0], sizes = [32, 20], strides = [1, 1]} : vector<32x40xf32> to vector<32x20xf32>
    %24 = vector.broadcast %7 : vector<1x20xf32> to vector<32x20xf32>
    %25 = arith.mulf %23, %24 : vector<32x20xf32>
    %cst_20 = arith.constant dense<0.000000e+00> : vector<32xf32>
    %26 = vector.multi_reduction <add>, %25, %cst_20 [1] : vector<32x20xf32> to vector<32xf32>
    %27 = vector.shape_cast %26 : vector<32xf32> to vector<32x1xf32>
    %28 = arith.mulf %25, %25 : vector<32x20xf32>
    %cst_21 = arith.constant dense<0.000000e+00> : vector<32xf32>
    %29 = vector.multi_reduction <add>, %28, %cst_21 [1] : vector<32x20xf32> to vector<32xf32>
    %30 = vector.shape_cast %29 : vector<32xf32> to vector<32x1xf32>
    %cst_22 = arith.constant dense<0.000000e+00> : vector<32x1xf32>
    %31 = tpu.matmul %8, %27, %cst_22 {dimension_numbers = #tpu.dot_dimension_numbers<[1], [0], [0], [1], [0, 0, 1, 1], [], []>} : vector<32x32xf32>, vector<32x1xf32>, vector<32x1xf32> -> vector<32x1xf32>
    %cst_23 = arith.constant dense<0.000000e+00> : vector<32x1xf32>
    %32 = tpu.matmul %8, %30, %cst_23 {dimension_numbers = #tpu.dot_dimension_numbers<[1], [0], [0], [1], [0, 0, 1, 1], [], []>} : vector<32x32xf32>, vector<32x1xf32>, vector<32x1xf32> -> vector<32x1xf32>
    %33 = arith.mulf %31, %31 : vector<32x1xf32>
    %34 = arith.subf %32, %33 : vector<32x1xf32>
    %cst_24 = arith.constant 9.99999974E-6 : f32
    %35 = vector.broadcast %cst_24 : f32 to vector<32x1xf32>
    %36 = arith.addf %34, %35 : vector<32x1xf32>
    %37 = math.rsqrt %36 : vector<32x1xf32>
    %38 = arith.mulf %9, %37 : vector<32x1xf32>
    %39 = arith.mulf %31, %38 : vector<32x1xf32>
    %40 = arith.subf %10, %39 : vector<32x1xf32>
    %41 = vector.broadcast %38 : vector<32x1xf32> to vector<32x20xf32>
    %42 = arith.mulf %23, %41 : vector<32x20xf32>
    %43 = vector.broadcast %40 : vector<32x1xf32> to vector<32x20xf32>
    %44 = arith.addf %42, %43 : vector<32x20xf32>
    %45 = math.absf %44 : vector<32x20xf32>
    %cst_25 = arith.constant 0.000000e+00 : f32
    %46 = vector.broadcast %cst_25 : f32 to vector<32x20xf32>
    %47 = arith.subf %46, %45 : vector<32x20xf32>
    %48 = math.exp %47 : vector<32x20xf32>
    %cst_26 = arith.constant 2.000000e+00 : f32
    %49 = vector.broadcast %cst_26 : f32 to vector<32x20xf32>
    %50 = arith.addf %48, %49 : vector<32x20xf32>
    %51 = arith.mulf %48, %50 : vector<32x20xf32>
    %cst_27 = arith.constant 0.000000e+00 : f32
    %52 = vector.broadcast %cst_27 : f32 to vector<32x20xf32>
    %53 = arith.cmpf oge, %44, %52 : vector<32x20xf32>
    %cst_28 = arith.constant 2.000000e+00 : f32
    %54 = vector.broadcast %cst_28 : f32 to vector<32x20xf32>
    %55 = arith.mulf %54, %48 : vector<32x20xf32>
    %cst_29 = arith.constant 1.000000e+00 : f32
    %56 = vector.broadcast %cst_29 : f32 to vector<32x20xf32>
    %57 = arith.addf %56, %55 : vector<32x20xf32>
    %58 = arith.select %53, %57, %51 : vector<32x20xi1>, vector<32x20xf32>
    %cst_30 = arith.constant 2.000000e+00 : f32
    %59 = vector.broadcast %cst_30 : f32 to vector<32x20xf32>
    %60 = arith.mulf %59, %48 : vector<32x20xf32>
    %61 = arith.mulf %60, %48 : vector<32x20xf32>
    %62 = arith.addf %58, %61 : vector<32x20xf32>
    %cst_31 = arith.constant 2.000000e+00 : f32
    %63 = vector.broadcast %cst_31 : f32 to vector<32x20xf32>
    %64 = arith.addf %51, %63 : vector<32x20xf32>
    %65 = arith.select %53, %62, %64 : vector<32x20xi1>, vector<32x20xf32>
    %66 = arith.mulf %44, %58 : vector<32x20xf32>
    %67 = tpu.reciprocal %65 {approx = true} : vector<32x20xf32> -> vector<32x20xf32>
    %68 = arith.mulf %66, %67 : vector<32x20xf32>
    %c0_32 = arith.constant 0 : index
    %c0_33 = arith.constant 0 : index
    %69 = vector.load %arg2[%c0_32, %c0_33] : memref<32x40xf32, #tpu.memory_space<vmem>>, vector<32x20xf32>
    %70 = arith.addf %68, %69 : vector<32x20xf32>
    %71 = vector.broadcast %7 : vector<1x20xf32> to vector<32x20xf32>
    %72 = arith.mulf %70, %71 : vector<32x20xf32>
    %73 = arith.truncf %72 : vector<32x20xf32> to vector<32x20xbf16>
    %c0_34 = arith.constant 0 : index
    %c2 = arith.constant 2 : index
    %74 = vector.load %arg15[%c0_34, %c2] : memref<32x44xbf16, #tpu.memory_space<vmem>>, vector<32x20xbf16>
    tpu.vector_store %arg15[%c0_34, %c2], %73 {strides = array<i32>} : memref<32x44xbf16, #tpu.memory_space<vmem>>, vector<32x20xbf16>,
    %75 = vector.extract_strided_slice %18 {offsets = [0, 20], sizes = [32, 20], strides = [1, 1]} : vector<32x40xf32> to vector<32x20xf32>
    %76 = vector.broadcast %7 : vector<1x20xf32> to vector<32x20xf32>
    %77 = arith.mulf %75, %76 : vector<32x20xf32>
    %cst_35 = arith.constant dense<0.000000e+00> : vector<32xf32>
    %78 = vector.multi_reduction <add>, %77, %cst_35 [1] : vector<32x20xf32> to vector<32xf32>
    %79 = vector.shape_cast %78 : vector<32xf32> to vector<32x1xf32>
    %80 = arith.mulf %77, %77 : vector<32x20xf32>
    %cst_36 = arith.constant dense<0.000000e+00> : vector<32xf32>
    %81 = vector.multi_reduction <add>, %80, %cst_36 [1] : vector<32x20xf32> to vector<32xf32>
    %82 = vector.shape_cast %81 : vector<32xf32> to vector<32x1xf32>
    %cst_37 = arith.constant dense<0.000000e+00> : vector<32x1xf32>
    %83 = tpu.matmul %8, %79, %cst_37 {dimension_numbers = #tpu.dot_dimension_numbers<[1], [0], [0], [1], [0, 0, 1, 1], [], []>} : vector<32x32xf32>, vector<32x1xf32>, vector<32x1xf32> -> vector<32x1xf32>
    %cst_38 = arith.constant dense<0.000000e+00> : vector<32x1xf32>
    %84 = tpu.matmul %8, %82, %cst_38 {dimension_numbers = #tpu.dot_dimension_numbers<[1], [0], [0], [1], [0, 0, 1, 1], [], []>} : vector<32x32xf32>, vector<32x1xf32>, vector<32x1xf32> -> vector<32x1xf32>
    %85 = arith.mulf %83, %83 : vector<32x1xf32>
    %86 = arith.subf %84, %85 : vector<32x1xf32>
    %cst_39 = arith.constant 9.99999974E-6 : f32
    %87 = vector.broadcast %cst_39 : f32 to vector<32x1xf32>
    %88 = arith.addf %86, %87 : vector<32x1xf32>
    %89 = math.rsqrt %88 : vector<32x1xf32>
    %90 = arith.mulf %9, %89 : vector<32x1xf32>
    %91 = arith.mulf %83, %90 : vector<32x1xf32>
    %92 = arith.subf %10, %91 : vector<32x1xf32>
    %93 = vector.broadcast %90 : vector<32x1xf32> to vector<32x20xf32>
    %94 = arith.mulf %75, %93 : vector<32x20xf32>
    %95 = vector.broadcast %92 : vector<32x1xf32> to vector<32x20xf32>
    %96 = arith.addf %94, %95 : vector<32x20xf32>
    %97 = math.absf %96 : vector<32x20xf32>
    %cst_40 = arith.constant 0.000000e+00 : f32
    %98 = vector.broadcast %cst_40 : f32 to vector<32x20xf32>
    %99 = arith.subf %98, %97 : vector<32x20xf32>
    %100 = math.exp %99 : vector<32x20xf32>
    %cst_41 = arith.constant 2.000000e+00 : f32
    %101 = vector.broadcast %cst_41 : f32 to vector<32x20xf32>
    %102 = arith.addf %100, %101 : vector<32x20xf32>
    %103 = arith.mulf %100, %102 : vector<32x20xf32>
    %cst_42 = arith.constant 0.000000e+00 : f32
    %104 = vector.broadcast %cst_42 : f32 to vector<32x20xf32>
    %105 = arith.cmpf oge, %96, %104 : vector<32x20xf32>
    %cst_43 = arith.constant 2.000000e+00 : f32
    %106 = vector.broadcast %cst_43 : f32 to vector<32x20xf32>
    %107 = arith.mulf %106, %100 : vector<32x20xf32>
    %cst_44 = arith.constant 1.000000e+00 : f32
    %108 = vector.broadcast %cst_44 : f32 to vector<32x20xf32>
    %109 = arith.addf %108, %107 : vector<32x20xf32>
    %110 = arith.select %105, %109, %103 : vector<32x20xi1>, vector<32x20xf32>
    %cst_45 = arith.constant 2.000000e+00 : f32
    %111 = vector.broadcast %cst_45 : f32 to vector<32x20xf32>
    %112 = arith.mulf %111, %100 : vector<32x20xf32>
    %113 = arith.mulf %112, %100 : vector<32x20xf32>
    %114 = arith.addf %110, %113 : vector<32x20xf32>
    %cst_46 = arith.constant 2.000000e+00 : f32
    %115 = vector.broadcast %cst_46 : f32 to vector<32x20xf32>
    %116 = arith.addf %103, %115 : vector<32x20xf32>
    %117 = arith.select %105, %114, %116 : vector<32x20xi1>, vector<32x20xf32>
    %118 = arith.mulf %96, %110 : vector<32x20xf32>
    %119 = tpu.reciprocal %117 {approx = true} : vector<32x20xf32> -> vector<32x20xf32>
    %120 = arith.mulf %118, %119 : vector<32x20xf32>
    %c0_47 = arith.constant 0 : index
    %c20 = arith.constant 20 : index
    %121 = vector.load %arg2[%c0_47, %c20] : memref<32x40xf32, #tpu.memory_space<vmem>>, vector<32x20xf32>
    %122 = arith.addf %120, %121 : vector<32x20xf32>
    %123 = vector.broadcast %7 : vector<1x20xf32> to vector<32x20xf32>
    %124 = arith.mulf %122, %123 : vector<32x20xf32>
    %125 = arith.truncf %124 : vector<32x20xf32> to vector<32x20xbf16>
    %c0_48 = arith.constant 0 : index
    %c22 = arith.constant 22 : index
    %126 = vector.load %arg15[%c0_48, %c22] : memref<32x44xbf16, #tpu.memory_space<vmem>>, vector<32x20xbf16>
    tpu.vector_store %arg15[%c0_48, %c22], %125 {strides = array<i32>} : memref<32x44xbf16, #tpu.memory_space<vmem>>, vector<32x20xbf16>,
    %c0_49 = arith.constant 0 : index
    %c0_50 = arith.constant 0 : index
    %127 = vector.load %arg15[%c0_49, %c0_50] : memref<32x44xbf16, #tpu.memory_space<vmem>>, vector<32x40xbf16>
    %c0_51 = arith.constant 0 : index
    %c1 = arith.constant 1 : index
    %128 = vector.load %arg15[%c0_51, %c1] : memref<32x44xbf16, #tpu.memory_space<vmem>>, vector<32x40xbf16>
    %c0_52 = arith.constant 0 : index
    %c2_53 = arith.constant 2 : index
    %129 = vector.load %arg15[%c0_52, %c2_53] : memref<32x44xbf16, #tpu.memory_space<vmem>>, vector<32x40xbf16>
    %c0_54 = arith.constant 0 : index
    %c3 = arith.constant 3 : index
    %130 = vector.load %arg15[%c0_54, %c3] : memref<32x44xbf16, #tpu.memory_space<vmem>>, vector<32x40xbf16>
    %c0_55 = arith.constant 0 : index
    %c4 = arith.constant 4 : index
    %131 = vector.load %arg15[%c0_55, %c4] : memref<32x44xbf16, #tpu.memory_space<vmem>>, vector<32x40xbf16>
    %132 = tpu.concatenate %127, %128, %129, %130, %131 in 0 : vector<32x40xbf16>, vector<32x40xbf16>, vector<32x40xbf16>, vector<32x40xbf16>, vector<32x40xbf16> -> vector<160x40xbf16>
    %c0_56 = arith.constant 0 : index
    %c0_57 = arith.constant 0 : index
    %133 = vector.load %arg8[%c0_56, %c0_57] : memref<32x160xbf16, #tpu.memory_space<vmem>>, vector<32x160xbf16>
    %cst_58 = arith.constant dense<0.000000e+00> : vector<32x40xf32>
    %134 = tpu.matmul %133, %132, %cst_58 {dimension_numbers = #tpu.dot_dimension_numbers<[1], [0], [0], [1], [0, 0, 1, 1], [], []>} : vector<32x160xbf16>, vector<160x40xbf16>, vector<32x40xf32> -> vector<32x40xf32>
    %c0_59 = arith.constant 0 : index
    %c0_60 = arith.constant 0 : index
    %135 = vector.load %arg9[%c0_59, %c0_60] : memref<32x1xf32, #tpu.memory_space<vmem>>, vector<32x1xf32>
    %136 = vector.broadcast %135 : vector<32x1xf32> to vector<32x40xf32>
    %137 = arith.addf %134, %136 : vector<32x40xf32>
    %c8 = arith.constant 8 : index
    %c0_61 = arith.constant 0 : index
    %138 = vector.load %arg1[%c8, %c0_61] : memref<20x40xbf16, #tpu.memory_space<vmem>>, vector<4x40xbf16>
    %c0_62 = arith.constant 0 : index
    %c0_63 = arith.constant 0 : index
    %139 = vector.load %arg12[%c0_62, %c0_63] : memref<32x4xbf16, #tpu.memory_space<vmem>>, vector<32x4xbf16>
    %cst_64 = arith.constant dense<0.000000e+00> : vector<32x40xf32>
    %140 = tpu.matmul %139, %138, %cst_64 {dimension_numbers = #tpu.dot_dimension_numbers<[1], [0], [0], [1], [0, 0, 1, 1], [], []>} : vector<32x4xbf16>, vector<4x40xbf16>, vector<32x40xf32> -> vector<32x40xf32>
    %c0_65 = arith.constant 0 : index
    %c0_66 = arith.constant 0 : index
    %141 = vector.load %arg13[%c0_65, %c0_66] : memref<32x1xf32, #tpu.memory_space<vmem>>, vector<32x1xf32>
    %142 = vector.broadcast %141 : vector<32x1xf32> to vector<32x40xf32>
    %143 = arith.addf %140, %142 : vector<32x40xf32>
    %144 = vector.extract_strided_slice %137 {offsets = [0, 0], sizes = [32, 20], strides = [1, 1]} : vector<32x40xf32> to vector<32x20xf32>
    %145 = vector.broadcast %7 : vector<1x20xf32> to vector<32x20xf32>
    %146 = arith.mulf %144, %145 : vector<32x20xf32>
    %cst_67 = arith.constant dense<0.000000e+00> : vector<32xf32>
    %147 = vector.multi_reduction <add>, %146, %cst_67 [1] : vector<32x20xf32> to vector<32xf32>
    %148 = vector.shape_cast %147 : vector<32xf32> to vector<32x1xf32>
    %149 = arith.mulf %146, %146 : vector<32x20xf32>
    %cst_68 = arith.constant dense<0.000000e+00> : vector<32xf32>
    %150 = vector.multi_reduction <add>, %149, %cst_68 [1] : vector<32x20xf32> to vector<32xf32>
    %151 = vector.shape_cast %150 : vector<32xf32> to vector<32x1xf32>
    %cst_69 = arith.constant dense<0.000000e+00> : vector<32x1xf32>
    %152 = tpu.matmul %8, %148, %cst_69 {dimension_numbers = #tpu.dot_dimension_numbers<[1], [0], [0], [1], [0, 0, 1, 1], [], []>} : vector<32x32xf32>, vector<32x1xf32>, vector<32x1xf32> -> vector<32x1xf32>
    %cst_70 = arith.constant dense<0.000000e+00> : vector<32x1xf32>
    %153 = tpu.matmul %8, %151, %cst_70 {dimension_numbers = #tpu.dot_dimension_numbers<[1], [0], [0], [1], [0, 0, 1, 1], [], []>} : vector<32x32xf32>, vector<32x1xf32>, vector<32x1xf32> -> vector<32x1xf32>
    %154 = arith.mulf %152, %152 : vector<32x1xf32>
    %155 = arith.subf %153, %154 : vector<32x1xf32>
    %cst_71 = arith.constant 9.99999974E-6 : f32
    %156 = vector.broadcast %cst_71 : f32 to vector<32x1xf32>
    %157 = arith.addf %155, %156 : vector<32x1xf32>
    %158 = math.rsqrt %157 : vector<32x1xf32>
    %159 = arith.mulf %11, %158 : vector<32x1xf32>
    %160 = arith.mulf %152, %159 : vector<32x1xf32>
    %161 = arith.subf %12, %160 : vector<32x1xf32>
    %162 = vector.broadcast %159 : vector<32x1xf32> to vector<32x20xf32>
    %163 = arith.mulf %144, %162 : vector<32x20xf32>
    %164 = vector.broadcast %161 : vector<32x1xf32> to vector<32x20xf32>
    %165 = arith.addf %163, %164 : vector<32x20xf32>
    %166 = math.absf %165 : vector<32x20xf32>
    %cst_72 = arith.constant 0.000000e+00 : f32
    %167 = vector.broadcast %cst_72 : f32 to vector<32x20xf32>
    %168 = arith.subf %167, %166 : vector<32x20xf32>
    %169 = math.exp %168 : vector<32x20xf32>
    %cst_73 = arith.constant 2.000000e+00 : f32
    %170 = vector.broadcast %cst_73 : f32 to vector<32x20xf32>
    %171 = arith.addf %169, %170 : vector<32x20xf32>
    %172 = arith.mulf %169, %171 : vector<32x20xf32>
    %cst_74 = arith.constant 0.000000e+00 : f32
    %173 = vector.broadcast %cst_74 : f32 to vector<32x20xf32>
    %174 = arith.cmpf oge, %165, %173 : vector<32x20xf32>
    %cst_75 = arith.constant 2.000000e+00 : f32
    %175 = vector.broadcast %cst_75 : f32 to vector<32x20xf32>
    %176 = arith.mulf %175, %169 : vector<32x20xf32>
    %cst_76 = arith.constant 1.000000e+00 : f32
    %177 = vector.broadcast %cst_76 : f32 to vector<32x20xf32>
    %178 = arith.addf %177, %176 : vector<32x20xf32>
    %179 = arith.select %174, %178, %172 : vector<32x20xi1>, vector<32x20xf32>
    %cst_77 = arith.constant 2.000000e+00 : f32
    %180 = vector.broadcast %cst_77 : f32 to vector<32x20xf32>
    %181 = arith.mulf %180, %169 : vector<32x20xf32>
    %182 = arith.mulf %181, %169 : vector<32x20xf32>
    %183 = arith.addf %179, %182 : vector<32x20xf32>
    %cst_78 = arith.constant 2.000000e+00 : f32
    %184 = vector.broadcast %cst_78 : f32 to vector<32x20xf32>
    %185 = arith.addf %172, %184 : vector<32x20xf32>
    %186 = arith.select %174, %183, %185 : vector<32x20xi1>, vector<32x20xf32>
    %187 = arith.mulf %165, %179 : vector<32x20xf32>
    %188 = tpu.reciprocal %186 {approx = true} : vector<32x20xf32> -> vector<32x20xf32>
    %189 = arith.mulf %187, %188 : vector<32x20xf32>
    %190 = vector.extract_strided_slice %143 {offsets = [0, 0], sizes = [32, 20], strides = [1, 1]} : vector<32x40xf32> to vector<32x20xf32>
    %191 = arith.addf %189, %190 : vector<32x20xf32>
    %c0_79 = arith.constant 0 : index
    %c0_80 = arith.constant 0 : index
    %192 = vector.load %arg14[%c0_79, %c0_80] : memref<32x40xf32, #tpu.memory_space<vmem>>, vector<32x20xf32>
    tpu.vector_store %arg14[%c0_79, %c0_80], %191 {strides = array<i32>} : memref<32x40xf32, #tpu.memory_space<vmem>>, vector<32x20xf32>,
    %193 = vector.extract_strided_slice %137 {offsets = [0, 20], sizes = [32, 20], strides = [1, 1]} : vector<32x40xf32> to vector<32x20xf32>
    %194 = vector.broadcast %7 : vector<1x20xf32> to vector<32x20xf32>
    %195 = arith.mulf %193, %194 : vector<32x20xf32>
    %cst_81 = arith.constant dense<0.000000e+00> : vector<32xf32>
    %196 = vector.multi_reduction <add>, %195, %cst_81 [1] : vector<32x20xf32> to vector<32xf32>
    %197 = vector.shape_cast %196 : vector<32xf32> to vector<32x1xf32>
    %198 = arith.mulf %195, %195 : vector<32x20xf32>
    %cst_82 = arith.constant dense<0.000000e+00> : vector<32xf32>
    %199 = vector.multi_reduction <add>, %198, %cst_82 [1] : vector<32x20xf32> to vector<32xf32>
    %200 = vector.shape_cast %199 : vector<32xf32> to vector<32x1xf32>
    %cst_83 = arith.constant dense<0.000000e+00> : vector<32x1xf32>
    %201 = tpu.matmul %8, %197, %cst_83 {dimension_numbers = #tpu.dot_dimension_numbers<[1], [0], [0], [1], [0, 0, 1, 1], [], []>} : vector<32x32xf32>, vector<32x1xf32>, vector<32x1xf32> -> vector<32x1xf32>
    %cst_84 = arith.constant dense<0.000000e+00> : vector<32x1xf32>
    %202 = tpu.matmul %8, %200, %cst_84 {dimension_numbers = #tpu.dot_dimension_numbers<[1], [0], [0], [1], [0, 0, 1, 1], [], []>} : vector<32x32xf32>, vector<32x1xf32>, vector<32x1xf32> -> vector<32x1xf32>
    %203 = arith.mulf %201, %201 : vector<32x1xf32>
    %204 = arith.subf %202, %203 : vector<32x1xf32>
    %cst_85 = arith.constant 9.99999974E-6 : f32
    %205 = vector.broadcast %cst_85 : f32 to vector<32x1xf32>
    %206 = arith.addf %204, %205 : vector<32x1xf32>
    %207 = math.rsqrt %206 : vector<32x1xf32>
    %208 = arith.mulf %11, %207 : vector<32x1xf32>
    %209 = arith.mulf %201, %208 : vector<32x1xf32>
    %210 = arith.subf %12, %209 : vector<32x1xf32>
    %211 = vector.broadcast %208 : vector<32x1xf32> to vector<32x20xf32>
    %212 = arith.mulf %193, %211 : vector<32x20xf32>
    %213 = vector.broadcast %210 : vector<32x1xf32> to vector<32x20xf32>
    %214 = arith.addf %212, %213 : vector<32x20xf32>
    %215 = math.absf %214 : vector<32x20xf32>
    %cst_86 = arith.constant 0.000000e+00 : f32
    %216 = vector.broadcast %cst_86 : f32 to vector<32x20xf32>
    %217 = arith.subf %216, %215 : vector<32x20xf32>
    %218 = math.exp %217 : vector<32x20xf32>
    %cst_87 = arith.constant 2.000000e+00 : f32
    %219 = vector.broadcast %cst_87 : f32 to vector<32x20xf32>
    %220 = arith.addf %218, %219 : vector<32x20xf32>
    %221 = arith.mulf %218, %220 : vector<32x20xf32>
    %cst_88 = arith.constant 0.000000e+00 : f32
    %222 = vector.broadcast %cst_88 : f32 to vector<32x20xf32>
    %223 = arith.cmpf oge, %214, %222 : vector<32x20xf32>
    %cst_89 = arith.constant 2.000000e+00 : f32
    %224 = vector.broadcast %cst_89 : f32 to vector<32x20xf32>
    %225 = arith.mulf %224, %218 : vector<32x20xf32>
    %cst_90 = arith.constant 1.000000e+00 : f32
    %226 = vector.broadcast %cst_90 : f32 to vector<32x20xf32>
    %227 = arith.addf %226, %225 : vector<32x20xf32>
    %228 = arith.select %223, %227, %221 : vector<32x20xi1>, vector<32x20xf32>
    %cst_91 = arith.constant 2.000000e+00 : f32
    %229 = vector.broadcast %cst_91 : f32 to vector<32x20xf32>
    %230 = arith.mulf %229, %218 : vector<32x20xf32>
    %231 = arith.mulf %230, %218 : vector<32x20xf32>
    %232 = arith.addf %228, %231 : vector<32x20xf32>
    %cst_92 = arith.constant 2.000000e+00 : f32
    %233 = vector.broadcast %cst_92 : f32 to vector<32x20xf32>
    %234 = arith.addf %221, %233 : vector<32x20xf32>
    %235 = arith.select %223, %232, %234 : vector<32x20xi1>, vector<32x20xf32>
    %236 = arith.mulf %214, %228 : vector<32x20xf32>
    %237 = tpu.reciprocal %235 {approx = true} : vector<32x20xf32> -> vector<32x20xf32>
    %238 = arith.mulf %236, %237 : vector<32x20xf32>
    %239 = vector.extract_strided_slice %143 {offsets = [0, 20], sizes = [32, 20], strides = [1, 1]} : vector<32x40xf32> to vector<32x20xf32>
    %240 = arith.addf %238, %239 : vector<32x20xf32>
    %c0_93 = arith.constant 0 : index
    %c20_94 = arith.constant 20 : index
    %241 = vector.load %arg14[%c0_93, %c20_94] : memref<32x40xf32, #tpu.memory_space<vmem>>, vector<32x20xf32>
    tpu.vector_store %arg14[%c0_93, %c20_94], %240 {strides = array<i32>} : memref<32x40xf32, #tpu.memory_space<vmem>>, vector<32x20xf32>,
    return
  }
  func.func @transform_0(%arg0: i32) -> (i32, i32) {
    %c0_i32 = arith.constant 0 : i32
    %c0_i32_0 = arith.constant 0 : i32
    return %c0_i32, %arg0 : i32, i32
  }
  func.func @transform_1(%arg0: i32) -> (i32, i32) {
    %c0_i32 = arith.constant 0 : i32
    %c0_i32_0 = arith.constant 0 : i32
    return %c0_i32, %arg0 : i32, i32
  }
  func.func @transform_2(%arg0: i32) -> (i32, i32) {
    %c0_i32 = arith.constant 0 : i32
    %c0_i32_0 = arith.constant 0 : i32
    %c0_i32_1 = arith.constant 0 : i32
    return %c0_i32, %c0_i32_0 : i32, i32
  }
  func.func @transform_3(%arg0: i32) -> (i32, i32) {
    %c0_i32 = arith.constant 0 : i32
    %c0_i32_0 = arith.constant 0 : i32
    %c0_i32_1 = arith.constant 0 : i32
    return %c0_i32, %c0_i32_0 : i32, i32
  }
  func.func @transform_4(%arg0: i32) -> (i32, i32) {
    %c0_i32 = arith.constant 0 : i32
    %c0_i32_0 = arith.constant 0 : i32
    %c0_i32_1 = arith.constant 0 : i32
    return %c0_i32, %c0_i32_0 : i32, i32
  }
  func.func @transform_5(%arg0: i32) -> (i32, i32) {
    %c0_i32 = arith.constant 0 : i32
    %c0_i32_0 = arith.constant 0 : i32
    %c0_i32_1 = arith.constant 0 : i32
    return %c0_i32, %c0_i32_0 : i32, i32
  }
  func.func @transform_6(%arg0: i32) -> (i32, i32) {
    %c0_i32 = arith.constant 0 : i32
    %c0_i32_0 = arith.constant 0 : i32
    %c0_i32_1 = arith.constant 0 : i32
    return %c0_i32, %c0_i32_0 : i32, i32
  }
  func.func @transform_7(%arg0: i32) -> (i32, i32) {
    %c0_i32 = arith.constant 0 : i32
    %c0_i32_0 = arith.constant 0 : i32
    %c0_i32_1 = arith.constant 0 : i32
    return %c0_i32, %c0_i32_0 : i32, i32
  }
  func.func @transform_8(%arg0: i32) -> (i32, i32) {
    %c0_i32 = arith.constant 0 : i32
    %c0_i32_0 = arith.constant 0 : i32
    %c0_i32_1 = arith.constant 0 : i32
    return %c0_i32, %c0_i32_0 : i32, i32
  }
  func.func @transform_9(%arg0: i32) -> (i32, i32) {
    %c0_i32 = arith.constant 0 : i32
    %c0_i32_0 = arith.constant 0 : i32
    %c0_i32_1 = arith.constant 0 : i32
    return %c0_i32, %c0_i32_0 : i32, i32
  }
  func.func @transform_10(%arg0: i32) -> (i32, i32) {
    %c0_i32 = arith.constant 0 : i32
    %c0_i32_0 = arith.constant 0 : i32
    %c0_i32_1 = arith.constant 0 : i32
    return %c0_i32, %c0_i32_0 : i32, i32
  }
  func.func @transform_11(%arg0: i32) -> (i32, i32) {
    %c0_i32 = arith.constant 0 : i32
    %c0_i32_0 = arith.constant 0 : i32
    %c0_i32_1 = arith.constant 0 : i32
    return %c0_i32, %c0_i32_0 : i32, i32
  }
  func.func @transform_12(%arg0: i32) -> (i32, i32) {
    %c0_i32 = arith.constant 0 : i32
    %c0_i32_0 = arith.constant 0 : i32
    %c0_i32_1 = arith.constant 0 : i32
    return %c0_i32, %c0_i32_0 : i32, i32
  }
  func.func @transform_13(%arg0: i32) -> (i32, i32) {
    %c0_i32 = arith.constant 0 : i32
    %c0_i32_0 = arith.constant 0 : i32
    return %c0_i32, %arg0 : i32, i32
  }
}

</mosaic_0001>

<llo_original>
// kernel: tpu_custom_call.1
$region0: #{tpu_custom_call.1}
  #allocation0 [shape = 'u32[]', space=smem, size = 0x4, offset = 0x4, fixed_abs, tag = 'smem constant byte address 0x4 - core index']
  #allocation1 [shape = 'u32[72,128]{1,0:T(1,128)}', space=vmem, size = 0x9000, scoped, tag = 'internal scratch']
  #allocation2 [shape = 'bf16[32,44]{1,0:T(8,128)(2,1)}', space=vmem, size = 0x2000, scoped, tag = 'scratch operand']
  %s0 = inlined_call_operand.vmem [shape: bf16[20,40], index: 0, kind: input, shape index: {}]
  %s1 = inlined_call_operand.vmem [shape: f32[32,40], index: 1, kind: input, shape index: {}]
  %s2 = inlined_call_operand.vmem [shape: bf16[32,20], index: 2, kind: input, shape index: {}]
  %s3 = inlined_call_operand.vmem [shape: f32[32,1], index: 3, kind: input, shape index: {}]
  %s4 = inlined_call_operand.vmem [shape: f32[32,1], index: 4, kind: input, shape index: {}]
  %s5 = inlined_call_operand.vmem [shape: f32[32,1], index: 5, kind: input, shape index: {}]
  %s6 = inlined_call_operand.vmem [shape: f32[32,32], index: 6, kind: input, shape index: {}]
  %s7 = inlined_call_operand.vmem [shape: bf16[32,160], index: 7, kind: input, shape index: {}]
  %s8 = inlined_call_operand.vmem [shape: f32[32,1], index: 8, kind: input, shape index: {}]
  %s9 = inlined_call_operand.vmem [shape: f32[32,1], index: 9, kind: input, shape index: {}]
  %s10 = inlined_call_operand.vmem [shape: f32[32,1], index: 10, kind: input, shape index: {}]
  %s11 = inlined_call_operand.vmem [shape: bf16[32,4], index: 11, kind: input, shape index: {}]
  %s12 = inlined_call_operand.vmem [shape: f32[32,1], index: 12, kind: input, shape index: {}]
  %s13 = inlined_call_operand.hbm [shape: f32[32,40], index: 13, kind: output, shape index: {}]
  %s14 = sld [smem:[#allocation0]]
  $region62: #{tpu_custom_call.1} parent=0
    _
  %s16 = ssub.s32 1, %s14
  %s17 = scalar_select 0, %s16, %s14
  $region1: #{tpu_custom_call.1} parent=0
    #allocation3 [shape = 'u8[16384]{0}', space=vmem, size = 0x4000, scoped, tag = 'output window, operand 0, single buffered']
    #allocation4 [shape = 's32[1]{0}', space=sflag, size = 0x4, scoped, tag = 'scoped memory for tpu_custom_call.1']
    %18 = vsyncpa [#allocation4], 0
    // Predicated region
    $region2: #{tpu_custom_call.1} parent=1 // pred_check
      _
    $region3: #{tpu_custom_call.1} parent=1 // pred_check_branch
      %20 = sbr.rel (0) target = $region5
    $region4: #{tpu_custom_call.1} parent=1 // pred_region
      _
    $region5: #{tpu_custom_call.1} parent=1 // pred_fallthru
      _
    // Predicated region
    $region6: #{tpu_custom_call.1} parent=1 // pred_check
      _
    $region7: #{tpu_custom_call.1} parent=1 // pred_check_branch
      %22 = sbr.rel (0) target = $region9
    $region8: #{tpu_custom_call.1} parent=1 // pred_region
      _
    $region9: #{tpu_custom_call.1} parent=1 // pred_fallthru
      _
    // Predicated region
    $region10: #{tpu_custom_call.1} parent=1 // pred_check
      _
    $region11: #{tpu_custom_call.1} parent=1 // pred_check_branch
      %24 = sbr.rel (0) target = $region13
    $region12: #{tpu_custom_call.1} parent=1 // pred_region
      _
    $region13: #{tpu_custom_call.1} parent=1 // pred_fallthru
      _
    // Predicated region
    $region14: #{tpu_custom_call.1} parent=1 // pred_check
      _
    $region15: #{tpu_custom_call.1} parent=1 // pred_check_branch
      %26 = sbr.rel (0) target = $region17
    $region16: #{tpu_custom_call.1} parent=1 // pred_region
      _
    $region17: #{tpu_custom_call.1} parent=1 // pred_fallthru
      _
    // Predicated region
    $region18: #{tpu_custom_call.1} parent=1 // pred_check
      _
    $region19: #{tpu_custom_call.1} parent=1 // pred_check_branch
      %28 = sbr.rel (0) target = $region21
    $region20: #{tpu_custom_call.1} parent=1 // pred_region
      _
    $region21: #{tpu_custom_call.1} parent=1 // pred_fallthru
      _
    // Predicated region
    $region22: #{tpu_custom_call.1} parent=1 // pred_check
      _
    $region23: #{tpu_custom_call.1} parent=1 // pred_check_branch
      %30 = sbr.rel (0) target = $region25
    $region24: #{tpu_custom_call.1} parent=1 // pred_region
      _
    $region25: #{tpu_custom_call.1} parent=1 // pred_fallthru
      _
    // Predicated region
    $region26: #{tpu_custom_call.1} parent=1 // pred_check
      _
    $region27: #{tpu_custom_call.1} parent=1 // pred_check_branch
      %32 = sbr.rel (0) target = $region29
    $region28: #{tpu_custom_call.1} parent=1 // pred_region
      _
    $region29: #{tpu_custom_call.1} parent=1 // pred_fallthru
      _
    // Predicated region
    $region30: #{tpu_custom_call.1} parent=1 // pred_check
      _
    $region31: #{tpu_custom_call.1} parent=1 // pred_check_branch
      %34 = sbr.rel (0) target = $region33
    $region32: #{tpu_custom_call.1} parent=1 // pred_region
      _
    $region33: #{tpu_custom_call.1} parent=1 // pred_fallthru
      _
    // Predicated region
    $region34: #{tpu_custom_call.1} parent=1 // pred_check
      _
    $region35: #{tpu_custom_call.1} parent=1 // pred_check_branch
      %36 = sbr.rel (0) target = $region37
    $region36: #{tpu_custom_call.1} parent=1 // pred_region
      _
    $region37: #{tpu_custom_call.1} parent=1 // pred_fallthru
      _
    // Predicated region
    $region38: #{tpu_custom_call.1} parent=1 // pred_check
      _
    $region39: #{tpu_custom_call.1} parent=1 // pred_check_branch
      %38 = sbr.rel (0) target = $region41
    $region40: #{tpu_custom_call.1} parent=1 // pred_region
      _
    $region41: #{tpu_custom_call.1} parent=1 // pred_fallthru
      _
    // Predicated region
    $region42: #{tpu_custom_call.1} parent=1 // pred_check
      _
    $region43: #{tpu_custom_call.1} parent=1 // pred_check_branch
      %40 = sbr.rel (0) target = $region45
    $region44: #{tpu_custom_call.1} parent=1 // pred_region
      _
    $region45: #{tpu_custom_call.1} parent=1 // pred_fallthru
      _
    // Predicated region
    $region46: #{tpu_custom_call.1} parent=1 // pred_check
      _
    $region47: #{tpu_custom_call.1} parent=1 // pred_check_branch
      %42 = sbr.rel (0) target = $region49
    $region48: #{tpu_custom_call.1} parent=1 // pred_region
      _
    $region49: #{tpu_custom_call.1} parent=1 // pred_fallthru
      _
    // Predicated region
    $region50: #{tpu_custom_call.1} parent=1 // pred_check
      _
    $region51: #{tpu_custom_call.1} parent=1 // pred_check_branch
      %44 = sbr.rel (0) target = $region53
    $region52: #{tpu_custom_call.1} parent=1 // pred_region
      _
    $region53: #{tpu_custom_call.1} parent=1 // pred_fallthru
      _
    %v46 = vlaneseq
    %v47 = vand.u32 %v46, 127
    %vm48 = vcmp.ge.s32.totalorder %v47, 2
    %vm49 = vcmp.lt.s32.totalorder %v47, 18
    %vm50 = vmand %vm48, %vm49
    %v51 = vsel %vm50, 1, 0
    %v52 = vcvt.s32.f32 %v51
    %v53 = vld [vmem:[%s6] sm:$0xff]
    %v54 = vld [vmem:[%s6 + $0x8] sm:$0xff]
    %v55 = vld [vmem:[%s6 + $0x10] sm:$0xff]
    %v56 = vld [vmem:[%s6 + $0x18] sm:$0xff]
    %v57 = vld [vmem:[%s4] sm:$0xff]
    %v58 = vld [vmem:[%s4 + $0x8] sm:$0xff]
    %v59 = vld [vmem:[%s4 + $0x10] sm:$0xff]
    %v60 = vld [vmem:[%s4 + $0x18] sm:$0xff]
    %v61 = vld [vmem:[%s5] sm:$0xff]
    %v62 = vld [vmem:[%s5 + $0x8] sm:$0xff]
    %v63 = vld [vmem:[%s5 + $0x10] sm:$0xff]
    %v64 = vld [vmem:[%s5 + $0x18] sm:$0xff]
    %v65 = vld [vmem:[%s9] sm:$0xff]
    %v66 = vld [vmem:[%s9 + $0x8] sm:$0xff]
    %v67 = vld [vmem:[%s9 + $0x10] sm:$0xff]
    %v68 = vld [vmem:[%s9 + $0x18] sm:$0xff]
    %v69 = vld [vmem:[%s10] sm:$0xff]
    %v70 = vld [vmem:[%s10 + $0x8] sm:$0xff]
    %v71 = vld [vmem:[%s10 + $0x10] sm:$0xff]
    %v72 = vld [vmem:[%s10 + $0x18] sm:$0xff]
    %v73 = vld [vmem:[%s2] sm:$0xf]
    %v74 = vld [vmem:[%s2 + $0x4] sm:$0xf]
    %v75 = vld [vmem:[%s2 + $0x8] sm:$0xf]
    %v76 = vld [vmem:[%s2 + $0xc] sm:$0xf]
    %v77 = vld [vmem:[%s0] sm:$0xf]
    %v78 = vld [vmem:[%s0 + $0x4] sm:$0xf]
    %v79 = vld [vmem:[%s0 + $0x8] sm:$0x3]
    %v80 = vld [vmem:[%s3] sm:$0xff]
    %v81 = vld [vmem:[%s3 + $0x8] sm:$0xff]
    %v82 = vld [vmem:[%s3 + $0x10] sm:$0xff]
    %v83 = vld [vmem:[%s3 + $0x18] sm:$0xff]
    %85 = vset.pattern.permute.xlu0 0
    %86 = vperm.xlu0 %85, %v80
    %v87 = vpop.permute.xlu0 %86
    %90 = vset.pattern.permute.xlu0 0
    %91 = vperm.xlu0 %90, %v81
    %v92 = vpop.permute.xlu0 %91
    %95 = vset.pattern.permute.xlu0 0
    %96 = vperm.xlu0 %95, %v82
    %v97 = vpop.permute.xlu0 %96
    %100 = vset.pattern.permute.xlu0 0
    %101 = vperm.xlu0 %100, %v83
    %v102 = vpop.permute.xlu0 %101
    %v108 = vunpack.c.l.b16 %v73
    %v109 = vunpack.c.l.b16 %v74
    %v110 = vunpack.c.l.b16 %v75
    %v111 = vunpack.c.l.b16 %v76
    %v112 = vpack.c.b16 %v109, %v108
    %v113 = vpack.c.b16 %v111, %v110
    %v117 = vunpack.c.l.b16 %v77
    %v118 = vunpack.c.l.b16 %v78
    %v119 = vunpack.c.l.b16 %v79
    %v120 = vpack.c.b16 %v118, %v117
    %v121 = vpack.c.b16 %v119, %v119
    %vm123 = vcmask 162816
    %v125 = vsel %vm123, %v112, 0
    %v128 = vsel %vm123, %v113, 0
    %vm130 = vcmask 1041408
    %v132 = vsel %vm130, %v121, 0
    %134 = vmatpush.bf16.msra.mxu0 0
    %135 = vmatpush.bf16.msra.mxu0 0
    %136 = vmatpush.bf16.msra.mxu0 0
    %137 = vmatpush.bf16.msra.mxu0 0
    %138 = vmatpush.bf16.msra.mxu0 0
    %139 = vmatpush.bf16.msra.mxu0 0
    %140 = vmatpush.bf16.msra.mxu0 %v132
    %141 = vmatpush.bf16.msra.mxu0 %v120
    %142 = vmatmul.bf16.gmra.mxu0 %v125
    %v143 = vpop.f32.mrf.mxu0
    %v144 = vadd.f32 %v87, %v143
    %v145 = vpop.f32.mrf.mxu0
    %v146 = vadd.f32 %v92, %v145
    %147 = vmatmul.bf16.gmra.mxu0 %v128
    %v148 = vpop.f32.mrf.mxu0
    %v149 = vadd.f32 %v97, %v148
    %v150 = vpop.f32.mrf.mxu0
    %v151 = vadd.f32 %v102, %v150
    %152 = vdwg.mxu0
    %vm153 = vcmask 11264
    %154 = vst.msk [vmem:[#allocation2] sm:$0xf] %vm153, 0
    %155 = vst.msk [vmem:[#allocation2 + $0x4] sm:$0xf] %vm153, 0
    %156 = vst.msk [vmem:[#allocation2 + $0x8] sm:$0xf] %vm153, 0
    %157 = vst.msk [vmem:[#allocation2 + $0xc] sm:$0xf] %vm153, 0
    %vm158 = vcmask 355664
    %159 = vst.msk [vmem:[#allocation2] sm:$0xf] %vm158, 0
    %160 = vst.msk [vmem:[#allocation2 + $0x4] sm:$0xf] %vm158, 0
    %161 = vst.msk [vmem:[#allocation2 + $0x8] sm:$0xf] %vm158, 0
    %162 = vst.msk [vmem:[#allocation2 + $0xc] sm:$0xf] %vm158, 0
    %v163 = vmul.f32 %v144, %v52
    %v164 = vmul.f32 %v146, %v52
    %v165 = vmul.f32 %v149, %v52
    %v166 = vmul.f32 %v151, %v52
    %v167 = vsel %vm123, %v163, 0.0
    %168 = vadd.xlane.f32.xlu0 %v167
    %v169 = vpop.xlane.xlu0 %168
    %v170 = vsel %vm123, %v164, 0.0
    %171 = vadd.xlane.f32.xlu0 %v170
    %v172 = vpop.xlane.xlu0 %171
    %v173 = vsel %vm123, %v165, 0.0
    %174 = vadd.xlane.f32.xlu0 %v173
    %v175 = vpop.xlane.xlu0 %174
    %v176 = vsel %vm123, %v166, 0.0
    %177 = vadd.xlane.f32.xlu0 %v176
    %v178 = vpop.xlane.xlu0 %177
    %v179 = vmul.f32 %v163, %v163
    %v180 = vmul.f32 %v164, %v164
    %v181 = vmul.f32 %v165, %v165
    %v182 = vmul.f32 %v166, %v166
    %v183 = vsel %vm123, %v179, 0.0
    %184 = vadd.xlane.f32.xlu0 %v183
    %v185 = vpop.xlane.xlu0 %184
    %v186 = vsel %vm123, %v180, 0.0
    %187 = vadd.xlane.f32.xlu0 %v186
    %v188 = vpop.xlane.xlu0 %187
    %v189 = vsel %vm123, %v181, 0.0
    %190 = vadd.xlane.f32.xlu0 %v189
    %v191 = vpop.xlane.xlu0 %190
    %v192 = vsel %vm123, %v182, 0.0
    %193 = vadd.xlane.f32.xlu0 %v192
    %v194 = vpop.xlane.xlu0 %193
    %vm195 = vcmask 261120
    %v197 = vsel %vm195, %v53, 0
    %v200 = vsel %vm195, %v54, 0
    %v203 = vsel %vm195, %v55, 0
    %v206 = vsel %vm195, %v56, 0
    %208 = vmatpush.msra.mxu0 0.0
    %209 = vmatpush.msra.mxu0 0.0
    %210 = vmatpush.msra.mxu0 0.0
    %211 = vmatpush.msra.mxu0 0.0
    %212 = vmatpush.msra.mxu0 0.0
    %213 = vmatpush.msra.mxu0 0.0
    %214 = vmatpush.msra.mxu0 0.0
    %215 = vmatpush.msra.mxu0 0.0
    %216 = vmatpush.msra.mxu0 0.0
    %217 = vmatpush.msra.mxu0 0.0
    %218 = vmatpush.msra.mxu0 0.0
    %219 = vmatpush.msra.mxu0 0.0
    %220 = vmatpush.msra.mxu0 %v178
    %221 = vmatpush.msra.mxu0 %v175
    %222 = vmatpush.msra.mxu0 %v172
    %223 = vmatpush.msra.mxu0 %v169
    %224 = vmatmul.f32.gmra.mxu0 %v197
    %v225 = vpop.f32.mrf.mxu0
    %v226 = vadd.f32 0.0, %v225
    %227 = vmatmul.f32.gmra.mxu0 %v200
    %v228 = vpop.f32.mrf.mxu0
    %v229 = vadd.f32 0.0, %v228
    %230 = vmatmul.f32.gmra.mxu0 %v203
    %v231 = vpop.f32.mrf.mxu0
    %v232 = vadd.f32 0.0, %v231
    %233 = vmatmul.f32.gmra.mxu0 %v206
    %v234 = vpop.f32.mrf.mxu0
    %v235 = vadd.f32 0.0, %v234
    %236 = vdwg.mxu0
    %237 = vmatpush.msra.mxu0 0.0
    %238 = vmatpush.msra.mxu0 0.0
    %239 = vmatpush.msra.mxu0 0.0
    %240 = vmatpush.msra.mxu0 0.0
    %241 = vmatpush.msra.mxu0 0.0
    %242 = vmatpush.msra.mxu0 0.0
    %243 = vmatpush.msra.mxu0 0.0
    %244 = vmatpush.msra.mxu0 0.0
    %245 = vmatpush.msra.mxu0 0.0
    %246 = vmatpush.msra.mxu0 0.0
    %247 = vmatpush.msra.mxu0 0.0
    %248 = vmatpush.msra.mxu0 0.0
    %249 = vmatpush.msra.mxu0 %v194
    %250 = vmatpush.msra.mxu0 %v191
    %251 = vmatpush.msra.mxu0 %v188
    %252 = vmatpush.msra.mxu0 %v185
    %253 = vmatmul.f32.gmra.mxu0 %v197
    %v254 = vpop.f32.mrf.mxu0
    %v255 = vadd.f32 0.0, %v254
    %256 = vmatmul.f32.gmra.mxu0 %v200
    %v257 = vpop.f32.mrf.mxu0
    %v258 = vadd.f32 0.0, %v257
    %259 = vmatmul.f32.gmra.mxu0 %v203
    %v260 = vpop.f32.mrf.mxu0
    %v261 = vadd.f32 0.0, %v260
    %262 = vmatmul.f32.gmra.mxu0 %v206
    %v263 = vpop.f32.mrf.mxu0
    %v264 = vadd.f32 0.0, %v263
    %265 = vdwg.mxu0
    %v266 = vmul.f32 %v226, %v226
    %v267 = vmul.f32 %v229, %v229
    %v268 = vmul.f32 %v232, %v232
    %v269 = vmul.f32 %v235, %v235
    %v270 = vsub.f32 %v255, %v266
    %v271 = vsub.f32 %v258, %v267
    %v272 = vsub.f32 %v261, %v268
    %v273 = vsub.f32 %v264, %v269
    %v274 = vadd.f32 %v270, 1e-05
    %v275 = vadd.f32 %v271, 1e-05
    %v276 = vadd.f32 %v272, 1e-05
    %v277 = vadd.f32 %v273, 1e-05
    %v278 = vrsqrt.pop %v274
    %v279 = vmul.f32 %v278, %v274
    %v280 = vmul.f32 %v279, %v278
    %v281 = vmul.f32 0.5, %v280
    %v282 = vsub.f32 1.5, %v281
    %v283 = vmul.f32 %v278, %v282
    %vm284 = vweird.f32 %v274
    %vm285 = vweird.f32 %v278
    %vm286 = vmor %vm284, %vm285
    %v287 = vsel %vm286, %v278, %v283
    %v288 = vrsqrt.pop %v275
    %v289 = vmul.f32 %v288, %v275
    %v290 = vmul.f32 %v289, %v288
    %v291 = vmul.f32 0.5, %v290
    %v292 = vsub.f32 1.5, %v291
    %v293 = vmul.f32 %v288, %v292
    %vm294 = vweird.f32 %v275
    %vm295 = vweird.f32 %v288
    %vm296 = vmor %vm294, %vm295
    %v297 = vsel %vm296, %v288, %v293
    %v298 = vrsqrt.pop %v276
    %v299 = vmul.f32 %v298, %v276
    %v300 = vmul.f32 %v299, %v298
    %v301 = vmul.f32 0.5, %v300
    %v302 = vsub.f32 1.5, %v301
    %v303 = vmul.f32 %v298, %v302
    %vm304 = vweird.f32 %v276
    %vm305 = vweird.f32 %v298
    %vm306 = vmor %vm304, %vm305
    %v307 = vsel %vm306, %v298, %v303
    %v308 = vrsqrt.pop %v277
    %v309 = vmul.f32 %v308, %v277
    %v310 = vmul.f32 %v309, %v308
    %v311 = vmul.f32 0.5, %v310
    %v312 = vsub.f32 1.5, %v311
    %v313 = vmul.f32 %v308, %v312
    %vm314 = vweird.f32 %v277
    %vm315 = vweird.f32 %v308
    %vm316 = vmor %vm314, %vm315
    %v317 = vsel %vm316, %v308, %v313
    %v318 = vmul.f32 %v57, %v287
    %v319 = vmul.f32 %v58, %v297
    %v320 = vmul.f32 %v59, %v307
    %v321 = vmul.f32 %v60, %v317
    %v322 = vmul.f32 %v226, %v318
    %v323 = vmul.f32 %v229, %v319
    %v324 = vmul.f32 %v232, %v320
    %v325 = vmul.f32 %v235, %v321
    %v326 = vsub.f32 %v61, %v322
    %v327 = vsub.f32 %v62, %v323
    %v328 = vsub.f32 %v63, %v324
    %v329 = vsub.f32 %v64, %v325
    %331 = vset.pattern.permute.xlu0 0
    %332 = vperm.xlu0 %331, %v318
    %v333 = vpop.permute.xlu0 %332
    %336 = vset.pattern.permute.xlu0 0
    %337 = vperm.xlu0 %336, %v319
    %v338 = vpop.permute.xlu0 %337
    %341 = vset.pattern.permute.xlu0 0
    %342 = vperm.xlu0 %341, %v320
    %v343 = vpop.permute.xlu0 %342
    %346 = vset.pattern.permute.xlu0 0
    %347 = vperm.xlu0 %346, %v321
    %v348 = vpop.permute.xlu0 %347
    %v350 = vmul.f32 %v144, %v333
    %v351 = vmul.f32 %v146, %v338
    %v352 = vmul.f32 %v149, %v343
    %v353 = vmul.f32 %v151, %v348
    %355 = vset.pattern.permute.xlu0 0
    %356 = vperm.xlu0 %355, %v326
    %v357 = vpop.permute.xlu0 %356
    %360 = vset.pattern.permute.xlu0 0
    %361 = vperm.xlu0 %360, %v327
    %v362 = vpop.permute.xlu0 %361
    %365 = vset.pattern.permute.xlu0 0
    %366 = vperm.xlu0 %365, %v328
    %v367 = vpop.permute.xlu0 %366
    %370 = vset.pattern.permute.xlu0 0
    %371 = vperm.xlu0 %370, %v329
    %v372 = vpop.permute.xlu0 %371
    %v374 = vadd.f32 %v350, %v357
    %v375 = vadd.f32 %v351, %v362
    %v376 = vadd.f32 %v352, %v367
    %v377 = vadd.f32 %v353, %v372
    %v378 = vand.u32 2147483647, %v374
    %v379 = vand.u32 2147483647, %v375
    %v380 = vand.u32 2147483647, %v376
    %v381 = vand.u32 2147483647, %v377
    %v382 = vsub.f32 0.0, %v378
    %v383 = vsub.f32 0.0, %v379
    %v384 = vsub.f32 0.0, %v380
    %v385 = vsub.f32 0.0, %v381
    %v386 = vmul.f32 %v382, 1.442695
    %v387 = vpow.pop %v386
    %v388 = vmul.f32 %v383, 1.442695
    %v389 = vpow.pop %v388
    %v390 = vmul.f32 %v384, 1.442695
    %v391 = vpow.pop %v390
    %v392 = vmul.f32 %v385, 1.442695
    %v393 = vpow.pop %v392
    %v394 = vadd.f32 %v387, 2.0
    %v395 = vadd.f32 %v389, 2.0
    %v396 = vadd.f32 %v391, 2.0
    %v397 = vadd.f32 %v393, 2.0
    %v398 = vmul.f32 %v387, %v394
    %v399 = vmul.f32 %v389, %v395
    %v400 = vmul.f32 %v391, %v396
    %v401 = vmul.f32 %v393, %v397
    %vm402 = vcmp.ge.f32.partialorder %v374, 0.0
    %vm403 = vcmp.ge.f32.partialorder %v375, 0.0
    %vm404 = vcmp.ge.f32.partialorder %v376, 0.0
    %vm405 = vcmp.ge.f32.partialorder %v377, 0.0
    %v406 = vmul.f32 %v387, 2.0
    %v407 = vmul.f32 %v389, 2.0
    %v408 = vmul.f32 %v391, 2.0
    %v409 = vmul.f32 %v393, 2.0
    %v410 = vadd.f32 %v406, 1.0
    %v411 = vadd.f32 %v407, 1.0
    %v412 = vadd.f32 %v408, 1.0
    %v413 = vadd.f32 %v409, 1.0
    %v414 = vsel %vm402, %v410, %v398
    %v415 = vsel %vm403, %v411, %v399
    %v416 = vsel %vm404, %v412, %v400
    %v417 = vsel %vm405, %v413, %v401
    %v418 = vmul.f32 %v406, %v387
    %v419 = vmul.f32 %v407, %v389
    %v420 = vmul.f32 %v408, %v391
    %v421 = vmul.f32 %v409, %v393
    %v422 = vadd.f32 %v414, %v418
    %v423 = vadd.f32 %v415, %v419
    %v424 = vadd.f32 %v416, %v420
    %v425 = vadd.f32 %v417, %v421
    %v426 = vadd.f32 %v398, 2.0
    %v427 = vadd.f32 %v399, 2.0
    %v428 = vadd.f32 %v400, 2.0
    %v429 = vadd.f32 %v401, 2.0
    %v430 = vsel %vm402, %v422, %v426
    %v431 = vsel %vm403, %v423, %v427
    %v432 = vsel %vm404, %v424, %v428
    %v433 = vsel %vm405, %v425, %v429
    %v434 = vmul.f32 %v374, %v414
    %v435 = vmul.f32 %v375, %v415
    %v436 = vmul.f32 %v376, %v416
    %v437 = vmul.f32 %v377, %v417
    %v438 = vrcp.pop %v430
    %v439 = vrcp.pop %v431
    %v440 = vrcp.pop %v432
    %v441 = vrcp.pop %v433
    %v442 = vmul.f32 %v434, %v438
    %v443 = vmul.f32 %v435, %v439
    %v444 = vmul.f32 %v436, %v440
    %v445 = vmul.f32 %v437, %v441
    %v446 = vld [vmem:[%s1] sm:$0xff]
    %v447 = vld [vmem:[%s1 + $0x8] sm:$0xff]
    %v448 = vld [vmem:[%s1 + $0x10] sm:$0xff]
    %v449 = vld [vmem:[%s1 + $0x18] sm:$0xff]
    %v450 = vadd.f32 %v442, %v446
    %v451 = vadd.f32 %v443, %v447
    %v452 = vadd.f32 %v444, %v448
    %v453 = vadd.f32 %v445, %v449
    %v454 = vmul.f32 %v450, %v52
    %v455 = vmul.f32 %v451, %v52
    %v456 = vmul.f32 %v452, %v52
    %v457 = vmul.f32 %v453, %v52
    %v458 = vpack.c.bf16 %v454, %v454
    %v459 = vpack.c.bf16 %v455, %v455
    %v460 = vpack.c.bf16 %v456, %v456
    %v461 = vpack.c.bf16 %v457, %v457
    %466 = vrot.lane.b32.xlu0 %v458, 2
    %v467 = vpop.permute.xlu0 %466
    %468 = vrot.lane.b32.xlu0 %v459, 2
    %v469 = vpop.permute.xlu0 %468
    %470 = vrot.lane.b32.xlu0 %v460, 2
    %v471 = vpop.permute.xlu0 %470
    %472 = vrot.lane.b32.xlu0 %v461, 2
    %v473 = vpop.permute.xlu0 %472
    %vm478 = vcmask 175120
    %479 = vst.msk [vmem:[#allocation2] sm:$0xf] %vm478, %v467
    %480 = vst.msk [vmem:[#allocation2 + $0x4] sm:$0xf] %vm478, %v469
    %481 = vst.msk [vmem:[#allocation2 + $0x8] sm:$0xf] %vm478, %v471
    %482 = vst.msk [vmem:[#allocation2 + $0xc] sm:$0xf] %vm478, %v473
    %484 = vrot.lane.b32.xlu0 %v52, 20
    %v485 = vpop.permute.xlu0 %484
    %v487 = vmul.f32 %v144, %v485
    %v488 = vmul.f32 %v146, %v485
    %v489 = vmul.f32 %v149, %v485
    %v490 = vmul.f32 %v151, %v485
    %495 = vrot.lane.b32.xlu0 %v487, 108
    %v496 = vpop.permute.xlu0 %495
    %497 = vrot.lane.b32.xlu0 %v488, 108
    %v498 = vpop.permute.xlu0 %497
    %499 = vrot.lane.b32.xlu0 %v489, 108
    %v500 = vpop.permute.xlu0 %499
    %501 = vrot.lane.b32.xlu0 %v490, 108
    %v502 = vpop.permute.xlu0 %501
    %v507 = vsel %vm123, %v496, 0.0
    %508 = vadd.xlane.f32.xlu0 %v507
    %v509 = vpop.xlane.xlu0 %508
    %v510 = vsel %vm123, %v498, 0.0
    %511 = vadd.xlane.f32.xlu0 %v510
    %v512 = vpop.xlane.xlu0 %511
    %v513 = vsel %vm123, %v500, 0.0
    %514 = vadd.xlane.f32.xlu0 %v513
    %v515 = vpop.xlane.xlu0 %514
    %v516 = vsel %vm123, %v502, 0.0
    %517 = vadd.xlane.f32.xlu0 %v516
    %v518 = vpop.xlane.xlu0 %517
    %v519 = vmul.f32 %v487, %v487
    %v520 = vmul.f32 %v488, %v488
    %v521 = vmul.f32 %v489, %v489
    %v522 = vmul.f32 %v490, %v490
    %527 = vrot.lane.b32.xlu0 %v519, 108
    %v528 = vpop.permute.xlu0 %527
    %529 = vrot.lane.b32.xlu0 %v520, 108
    %v530 = vpop.permute.xlu0 %529
    %531 = vrot.lane.b32.xlu0 %v521, 108
    %v532 = vpop.permute.xlu0 %531
    %533 = vrot.lane.b32.xlu0 %v522, 108
    %v534 = vpop.permute.xlu0 %533
    %v539 = vsel %vm123, %v528, 0.0
    %540 = vadd.xlane.f32.xlu0 %v539
    %v541 = vpop.xlane.xlu0 %540
    %v542 = vsel %vm123, %v530, 0.0
    %543 = vadd.xlane.f32.xlu0 %v542
    %v544 = vpop.xlane.xlu0 %543
    %v545 = vsel %vm123, %v532, 0.0
    %546 = vadd.xlane.f32.xlu0 %v545
    %v547 = vpop.xlane.xlu0 %546
    %v548 = vsel %vm123, %v534, 0.0
    %549 = vadd.xlane.f32.xlu0 %v548
    %v550 = vpop.xlane.xlu0 %549
    %551 = vmatpush.msra.mxu0 0.0
    %552 = vmatpush.msra.mxu0 0.0
    %553 = vmatpush.msra.mxu0 0.0
    %554 = vmatpush.msra.mxu0 0.0
    %555 = vmatpush.msra.mxu0 0.0
    %556 = vmatpush.msra.mxu0 0.0
    %557 = vmatpush.msra.mxu0 0.0
    %558 = vmatpush.msra.mxu0 0.0
    %559 = vmatpush.msra.mxu0 0.0
    %560 = vmatpush.msra.mxu0 0.0
    %561 = vmatpush.msra.mxu0 0.0
    %562 = vmatpush.msra.mxu0 0.0
    %563 = vmatpush.msra.mxu0 %v518
    %564 = vmatpush.msra.mxu0 %v515
    %565 = vmatpush.msra.mxu0 %v512
    %566 = vmatpush.msra.mxu0 %v509
    %567 = vmatmul.f32.gmra.mxu0 %v197
    %v568 = vpop.f32.mrf.mxu0
    %v569 = vadd.f32 0.0, %v568
    %570 = vmatmul.f32.gmra.mxu0 %v200
    %v571 = vpop.f32.mrf.mxu0
    %v572 = vadd.f32 0.0, %v571
    %573 = vmatmul.f32.gmra.mxu0 %v203
    %v574 = vpop.f32.mrf.mxu0
    %v575 = vadd.f32 0.0, %v574
    %576 = vmatmul.f32.gmra.mxu0 %v206
    %v577 = vpop.f32.mrf.mxu0
    %v578 = vadd.f32 0.0, %v577
    %579 = vdwg.mxu0
    %580 = vmatpush.msra.mxu0 0.0
    %581 = vmatpush.msra.mxu0 0.0
    %582 = vmatpush.msra.mxu0 0.0
    %583 = vmatpush.msra.mxu0 0.0
    %584 = vmatpush.msra.mxu0 0.0
    %585 = vmatpush.msra.mxu0 0.0
    %586 = vmatpush.msra.mxu0 0.0
    %587 = vmatpush.msra.mxu0 0.0
    %588 = vmatpush.msra.mxu0 0.0
    %589 = vmatpush.msra.mxu0 0.0
    %590 = vmatpush.msra.mxu0 0.0
    %591 = vmatpush.msra.mxu0 0.0
    %592 = vmatpush.msra.mxu0 %v550
    %593 = vmatpush.msra.mxu0 %v547
    %594 = vmatpush.msra.mxu0 %v544
    %595 = vmatpush.msra.mxu0 %v541
    %596 = vmatmul.f32.gmra.mxu0 %v197
    %v597 = vpop.f32.mrf.mxu0
    %v598 = vadd.f32 0.0, %v597
    %599 = vmatmul.f32.gmra.mxu0 %v200
    %v600 = vpop.f32.mrf.mxu0
    %v601 = vadd.f32 0.0, %v600
    %602 = vmatmul.f32.gmra.mxu0 %v203
    %v603 = vpop.f32.mrf.mxu0
    %v604 = vadd.f32 0.0, %v603
    %605 = vmatmul.f32.gmra.mxu0 %v206
    %v606 = vpop.f32.mrf.mxu0
    %v607 = vadd.f32 0.0, %v606
    %608 = vdwg.mxu0
    %v609 = vmul.f32 %v569, %v569
    %v610 = vmul.f32 %v572, %v572
    %v611 = vmul.f32 %v575, %v575
    %v612 = vmul.f32 %v578, %v578
    %v613 = vsub.f32 %v598, %v609
    %v614 = vsub.f32 %v601, %v610
    %v615 = vsub.f32 %v604, %v611
    %v616 = vsub.f32 %v607, %v612
    %v617 = vadd.f32 %v613, 1e-05
    %v618 = vadd.f32 %v614, 1e-05
    %v619 = vadd.f32 %v615, 1e-05
    %v620 = vadd.f32 %v616, 1e-05
    %v621 = vrsqrt.pop %v617
    %v622 = vmul.f32 %v621, %v617
    %v623 = vmul.f32 %v622, %v621
    %v624 = vmul.f32 0.5, %v623
    %v625 = vsub.f32 1.5, %v624
    %v626 = vmul.f32 %v621, %v625
    %vm627 = vweird.f32 %v617
    %vm628 = vweird.f32 %v621
    %vm629 = vmor %vm627, %vm628
    %v630 = vsel %vm629, %v621, %v626
    %v631 = vrsqrt.pop %v618
    %v632 = vmul.f32 %v631, %v618
    %v633 = vmul.f32 %v632, %v631
    %v634 = vmul.f32 0.5, %v633
    %v635 = vsub.f32 1.5, %v634
    %v636 = vmul.f32 %v631, %v635
    %vm637 = vweird.f32 %v618
    %vm638 = vweird.f32 %v631
    %vm639 = vmor %vm637, %vm638
    %v640 = vsel %vm639, %v631, %v636
    %v641 = vrsqrt.pop %v619
    %v642 = vmul.f32 %v641, %v619
    %v643 = vmul.f32 %v642, %v641
    %v644 = vmul.f32 0.5, %v643
    %v645 = vsub.f32 1.5, %v644
    %v646 = vmul.f32 %v641, %v645
    %vm647 = vweird.f32 %v619
    %vm648 = vweird.f32 %v641
    %vm649 = vmor %vm647, %vm648
    %v650 = vsel %vm649, %v641, %v646
    %v651 = vrsqrt.pop %v620
    %v652 = vmul.f32 %v651, %v620
    %v653 = vmul.f32 %v652, %v651
    %v654 = vmul.f32 0.5, %v653
    %v655 = vsub.f32 1.5, %v654
    %v656 = vmul.f32 %v651, %v655
    %vm657 = vweird.f32 %v620
    %vm658 = vweird.f32 %v651
    %vm659 = vmor %vm657, %vm658
    %v660 = vsel %vm659, %v651, %v656
    %v661 = vmul.f32 %v57, %v630
    %v662 = vmul.f32 %v58, %v640
    %v663 = vmul.f32 %v59, %v650
    %v664 = vmul.f32 %v60, %v660
    %v665 = vmul.f32 %v569, %v661
    %v666 = vmul.f32 %v572, %v662
    %v667 = vmul.f32 %v575, %v663
    %v668 = vmul.f32 %v578, %v664
    %v669 = vsub.f32 %v61, %v665
    %v670 = vsub.f32 %v62, %v666
    %v671 = vsub.f32 %v63, %v667
    %v672 = vsub.f32 %v64, %v668
    %674 = vset.pattern.permute.xlu0 0
    %675 = vperm.xlu0 %674, %v661
    %v676 = vpop.permute.xlu0 %675
    %679 = vset.pattern.permute.xlu0 0
    %680 = vperm.xlu0 %679, %v662
    %v681 = vpop.permute.xlu0 %680
    %684 = vset.pattern.permute.xlu0 0
    %685 = vperm.xlu0 %684, %v663
    %v686 = vpop.permute.xlu0 %685
    %689 = vset.pattern.permute.xlu0 0
    %690 = vperm.xlu0 %689, %v664
    %v691 = vpop.permute.xlu0 %690
    %v693 = vmul.f32 %v144, %v676
    %v694 = vmul.f32 %v146, %v681
    %v695 = vmul.f32 %v149, %v686
    %v696 = vmul.f32 %v151, %v691
    %698 = vset.pattern.permute.xlu0 0
    %699 = vperm.xlu0 %698, %v669
    %v700 = vpop.permute.xlu0 %699
    %703 = vset.pattern.permute.xlu0 0
    %704 = vperm.xlu0 %703, %v670
    %v705 = vpop.permute.xlu0 %704
    %708 = vset.pattern.permute.xlu0 0
    %709 = vperm.xlu0 %708, %v671
    %v710 = vpop.permute.xlu0 %709
    %713 = vset.pattern.permute.xlu0 0
    %714 = vperm.xlu0 %713, %v672
    %v715 = vpop.permute.xlu0 %714
    %v717 = vadd.f32 %v693, %v700
    %v718 = vadd.f32 %v694, %v705
    %v719 = vadd.f32 %v695, %v710
    %v720 = vadd.f32 %v696, %v715
    %v721 = vand.u32 2147483647, %v717
    %v722 = vand.u32 2147483647, %v718
    %v723 = vand.u32 2147483647, %v719
    %v724 = vand.u32 2147483647, %v720
    %v725 = vsub.f32 0.0, %v721
    %v726 = vsub.f32 0.0, %v722
    %v727 = vsub.f32 0.0, %v723
    %v728 = vsub.f32 0.0, %v724
    %v729 = vmul.f32 %v725, 1.442695
    %v730 = vpow.pop %v729
    %v731 = vmul.f32 %v726, 1.442695
    %v732 = vpow.pop %v731
    %v733 = vmul.f32 %v727, 1.442695
    %v734 = vpow.pop %v733
    %v735 = vmul.f32 %v728, 1.442695
    %v736 = vpow.pop %v735
    %v737 = vadd.f32 %v730, 2.0
    %v738 = vadd.f32 %v732, 2.0
    %v739 = vadd.f32 %v734, 2.0
    %v740 = vadd.f32 %v736, 2.0
    %v741 = vmul.f32 %v730, %v737
    %v742 = vmul.f32 %v732, %v738
    %v743 = vmul.f32 %v734, %v739
    %v744 = vmul.f32 %v736, %v740
    %vm745 = vcmp.ge.f32.partialorder %v717, 0.0
    %vm746 = vcmp.ge.f32.partialorder %v718, 0.0
    %vm747 = vcmp.ge.f32.partialorder %v719, 0.0
    %vm748 = vcmp.ge.f32.partialorder %v720, 0.0
    %v749 = vmul.f32 %v730, 2.0
    %v750 = vmul.f32 %v732, 2.0
    %v751 = vmul.f32 %v734, 2.0
    %v752 = vmul.f32 %v736, 2.0
    %v753 = vadd.f32 %v749, 1.0
    %v754 = vadd.f32 %v750, 1.0
    %v755 = vadd.f32 %v751, 1.0
    %v756 = vadd.f32 %v752, 1.0
    %v757 = vsel %vm745, %v753, %v741
    %v758 = vsel %vm746, %v754, %v742
    %v759 = vsel %vm747, %v755, %v743
    %v760 = vsel %vm748, %v756, %v744
    %v761 = vmul.f32 %v749, %v730
    %v762 = vmul.f32 %v750, %v732
    %v763 = vmul.f32 %v751, %v734
    %v764 = vmul.f32 %v752, %v736
    %v765 = vadd.f32 %v757, %v761
    %v766 = vadd.f32 %v758, %v762
    %v767 = vadd.f32 %v759, %v763
    %v768 = vadd.f32 %v760, %v764
    %v769 = vadd.f32 %v741, 2.0
    %v770 = vadd.f32 %v742, 2.0
    %v771 = vadd.f32 %v743, 2.0
    %v772 = vadd.f32 %v744, 2.0
    %v773 = vsel %vm745, %v765, %v769
    %v774 = vsel %vm746, %v766, %v770
    %v775 = vsel %vm747, %v767, %v771
    %v776 = vsel %vm748, %v768, %v772
    %v777 = vmul.f32 %v717, %v757
    %v778 = vmul.f32 %v718, %v758
    %v779 = vmul.f32 %v719, %v759
    %v780 = vmul.f32 %v720, %v760
    %v781 = vrcp.pop %v773
    %v782 = vrcp.pop %v774
    %v783 = vrcp.pop %v775
    %v784 = vrcp.pop %v776
    %v785 = vmul.f32 %v777, %v781
    %v786 = vmul.f32 %v778, %v782
    %v787 = vmul.f32 %v779, %v783
    %v788 = vmul.f32 %v780, %v784
    %v789 = vld [vmem:[%s1] sm:$0xff]
    %v790 = vld [vmem:[%s1 + $0x8] sm:$0xff]
    %v791 = vld [vmem:[%s1 + $0x10] sm:$0xff]
    %v792 = vld [vmem:[%s1 + $0x18] sm:$0xff]
    %v793 = vadd.f32 %v785, %v789
    %v794 = vadd.f32 %v786, %v790
    %v795 = vadd.f32 %v787, %v791
    %v796 = vadd.f32 %v788, %v792
    %v797 = vmul.f32 %v793, %v485
    %v798 = vmul.f32 %v794, %v485
    %v799 = vmul.f32 %v795, %v485
    %v800 = vmul.f32 %v796, %v485
    %v801 = vpack.c.bf16 %v797, %v797
    %v802 = vpack.c.bf16 %v798, %v798
    %v803 = vpack.c.bf16 %v799, %v799
    %v804 = vpack.c.bf16 %v800, %v800
    %809 = vrot.lane.b32.xlu0 %v801, 2
    %v810 = vpop.permute.xlu0 %809
    %811 = vrot.lane.b32.xlu0 %v802, 2
    %v812 = vpop.permute.xlu0 %811
    %813 = vrot.lane.b32.xlu0 %v803, 2
    %v814 = vpop.permute.xlu0 %813
    %815 = vrot.lane.b32.xlu0 %v804, 2
    %v816 = vpop.permute.xlu0 %815
    %vm821 = vcmask 339120
    %822 = vst.msk [vmem:[#allocation2] sm:$0xf] %vm821, %v810
    %823 = vst.msk [vmem:[#allocation2 + $0x4] sm:$0xf] %vm821, %v812
    %824 = vst.msk [vmem:[#allocation2 + $0x8] sm:$0xf] %vm821, %v814
    %825 = vst.msk [vmem:[#allocation2 + $0xc] sm:$0xf] %vm821, %v816
    %v826 = vld [vmem:[#allocation2] sm:$0xf]
    %v827 = vld [vmem:[#allocation2 + $0x4] sm:$0xf]
    %v828 = vld [vmem:[#allocation2 + $0x8] sm:$0xf]
    %v829 = vld [vmem:[#allocation2 + $0xc] sm:$0xf]
    %v834 = vunpack.c.l.b16 %v826
    %v835 = vunpack.c.l.b16 %v827
    %v836 = vunpack.c.l.b16 %v828
    %v837 = vunpack.c.l.b16 %v829
    %v838 = vpack.c.b16 %v835, %v834
    %v839 = vpack.c.b16 %v837, %v836
    %842 = vrot.lane.b32.xlu0 %v838, 127
    %v843 = vpop.permute.xlu0 %842
    %844 = vrot.lane.b32.xlu0 %v839, 127
    %v845 = vpop.permute.xlu0 %844
    %848 = vrot.lane.b32.xlu0 %v838, 126
    %v849 = vpop.permute.xlu0 %848
    %850 = vrot.lane.b32.xlu0 %v839, 126
    %v851 = vpop.permute.xlu0 %850
    %854 = vrot.lane.b32.xlu0 %v838, 125
    %v855 = vpop.permute.xlu0 %854
    %856 = vrot.lane.b32.xlu0 %v839, 125
    %v857 = vpop.permute.xlu0 %856
    %860 = vrot.lane.b32.xlu0 %v838, 124
    %v861 = vpop.permute.xlu0 %860
    %862 = vrot.lane.b32.xlu0 %v839, 124
    %v863 = vpop.permute.xlu0 %862
    %v866 = vld [vmem:[%s7] sm:$0xff]
    %v867 = vld [vmem:[%s7 + $0x8] sm:$0xff]
    %v868 = vld [vmem:[%s7 + $0x10] sm:$0xff]
    %v869 = vld [vmem:[%s7 + $0x18] sm:$0xff]
    %v870 = vld [vmem:[%s8] sm:$0xff]
    %v871 = vld [vmem:[%s8 + $0x8] sm:$0xff]
    %v872 = vld [vmem:[%s8 + $0x10] sm:$0xff]
    %v873 = vld [vmem:[%s8 + $0x18] sm:$0xff]
    %875 = vset.pattern.permute.xlu0 0
    %876 = vperm.xlu0 %875, %v870
    %v877 = vpop.permute.xlu0 %876
    %880 = vset.pattern.permute.xlu0 0
    %881 = vperm.xlu0 %880, %v871
    %v882 = vpop.permute.xlu0 %881
    %885 = vset.pattern.permute.xlu0 0
    %886 = vperm.xlu0 %885, %v872
    %v887 = vpop.permute.xlu0 %886
    %890 = vset.pattern.permute.xlu0 0
    %891 = vperm.xlu0 %890, %v873
    %v892 = vpop.permute.xlu0 %891
    %v898 = vunpack.c.l.b16 %v866
    %v899 = vunpack.c.h.b16 %v866
    %v900 = vunpack.c.l.b16 %v867
    %v901 = vunpack.c.h.b16 %v867
    %v902 = vunpack.c.l.b16 %v868
    %v903 = vunpack.c.h.b16 %v868
    %v904 = vunpack.c.l.b16 %v869
    %v905 = vunpack.c.h.b16 %v869
    %v906 = vpack.c.b16 %v900, %v898
    %v907 = vpack.c.b16 %v901, %v899
    %v908 = vpack.c.b16 %v904, %v902
    %v909 = vpack.c.b16 %v905, %v903
    %v913 = vsel %vm195, %v907, 0
    %v916 = vsel %vm195, %v909, 0
    %918 = vmatpush.bf16.msra.mxu0 %v857
    %919 = vmatpush.bf16.msra.mxu0 %v855
    %920 = vmatpush.bf16.msra.mxu0 %v851
    %921 = vmatpush.bf16.msra.mxu0 %v849
    %922 = vmatpush.bf16.msra.mxu0 %v845
    %923 = vmatpush.bf16.msra.mxu0 %v843
    %924 = vmatpush.bf16.msra.mxu0 %v839
    %925 = vmatpush.bf16.msra.mxu0 %v838
    %926 = vmatmul.bf16.gmra.mxu0 %v906
    %v927 = vpop.f32.mrf.mxu0
    %v928 = vadd.f32 %v877, %v927
    %v929 = vpop.f32.mrf.mxu0
    %v930 = vadd.f32 %v882, %v929
    %931 = vmatmul.bf16.gmra.mxu0 %v908
    %v932 = vpop.f32.mrf.mxu0
    %v933 = vadd.f32 %v887, %v932
    %v934 = vpop.f32.mrf.mxu0
    %v935 = vadd.f32 %v892, %v934
    %936 = vdwg.mxu0
    %937 = vmatpush.bf16.msra.mxu0 0
    %938 = vmatpush.bf16.msra.mxu0 0
    %939 = vmatpush.bf16.msra.mxu0 0
    %940 = vmatpush.bf16.msra.mxu0 0
    %941 = vmatpush.bf16.msra.mxu0 0
    %942 = vmatpush.bf16.msra.mxu0 0
    %943 = vmatpush.bf16.msra.mxu0 %v863
    %944 = vmatpush.bf16.msra.mxu0 %v861
    %945 = vmatmul.bf16.gmra.mxu0 %v913
    %v946 = vpop.f32.mrf.mxu0
    %v947 = vadd.f32 %v928, %v946
    %v948 = vpop.f32.mrf.mxu0
    %v949 = vadd.f32 %v930, %v948
    %950 = vmatmul.bf16.gmra.mxu0 %v916
    %v951 = vpop.f32.mrf.mxu0
    %v952 = vadd.f32 %v933, %v951
    %v953 = vpop.f32.mrf.mxu0
    %v954 = vadd.f32 %v935, %v953
    %955 = vdwg.mxu0
    %v956 = vld [vmem:[%s0 + $0x4] sm:$0x3]
    %v957 = vld [vmem:[%s11] sm:$0xf]
    %v958 = vld [vmem:[%s11 + $0x4] sm:$0xf]
    %v959 = vld [vmem:[%s11 + $0x8] sm:$0xf]
    %v960 = vld [vmem:[%s11 + $0xc] sm:$0xf]
    %v961 = vld [vmem:[%s12] sm:$0xff]
    %v962 = vld [vmem:[%s12 + $0x8] sm:$0xff]
    %v963 = vld [vmem:[%s12 + $0x10] sm:$0xff]
    %v964 = vld [vmem:[%s12 + $0x18] sm:$0xff]
    %966 = vset.pattern.permute.xlu0 0
    %967 = vperm.xlu0 %966, %v961
    %v968 = vpop.permute.xlu0 %967
    %971 = vset.pattern.permute.xlu0 0
    %972 = vperm.xlu0 %971, %v962
    %v973 = vpop.permute.xlu0 %972
    %976 = vset.pattern.permute.xlu0 0
    %977 = vperm.xlu0 %976, %v963
    %v978 = vpop.permute.xlu0 %977
    %981 = vset.pattern.permute.xlu0 0
    %982 = vperm.xlu0 %981, %v964
    %v983 = vpop.permute.xlu0 %982
    %v989 = vunpack.c.l.b16 %v957
    %v990 = vunpack.c.l.b16 %v958
    %v991 = vunpack.c.l.b16 %v959
    %v992 = vunpack.c.l.b16 %v960
    %v993 = vpack.c.b16 %v990, %v989
    %v994 = vpack.c.b16 %v992, %v991
    %vm995 = vcmask 31744
    %v997 = vsel %vm995, %v993, 0
    %v1000 = vsel %vm995, %v994, 0
    %v1003 = vsel %vm130, %v956, 0
    %1005 = vmatpush.bf16.msra.mxu0 0
    %1006 = vmatpush.bf16.msra.mxu0 0
    %1007 = vmatpush.bf16.msra.mxu0 0
    %1008 = vmatpush.bf16.msra.mxu0 0
    %1009 = vmatpush.bf16.msra.mxu0 0
    %1010 = vmatpush.bf16.msra.mxu0 0
    %1011 = vmatpush.bf16.msra.mxu0 0
    %1012 = vmatpush.bf16.msra.mxu0 %v1003
    %1013 = vmatmul.bf16.gmra.mxu0 %v997
    %v1014 = vpop.f32.mrf.mxu0
    %v1015 = vadd.f32 %v968, %v1014
    %v1016 = vpop.f32.mrf.mxu0
    %v1017 = vadd.f32 %v973, %v1016
    %1018 = vmatmul.bf16.gmra.mxu0 %v1000
    %v1019 = vpop.f32.mrf.mxu0
    %v1020 = vadd.f32 %v978, %v1019
    %v1021 = vpop.f32.mrf.mxu0
    %v1022 = vadd.f32 %v983, %v1021
    %1023 = vdwg.mxu0
    %v1024 = vmul.f32 %v947, %v52
    %v1025 = vmul.f32 %v949, %v52
    %v1026 = vmul.f32 %v952, %v52
    %v1027 = vmul.f32 %v954, %v52
    %v1028 = vsel %vm123, %v1024, 0.0
    %1029 = vadd.xlane.f32.xlu0 %v1028
    %v1030 = vpop.xlane.xlu0 %1029
    %v1031 = vsel %vm123, %v1025, 0.0
    %1032 = vadd.xlane.f32.xlu0 %v1031
    %v1033 = vpop.xlane.xlu0 %1032
    %v1034 = vsel %vm123, %v1026, 0.0
    %1035 = vadd.xlane.f32.xlu0 %v1034
    %v1036 = vpop.xlane.xlu0 %1035
    %v1037 = vsel %vm123, %v1027, 0.0
    %1038 = vadd.xlane.f32.xlu0 %v1037
    %v1039 = vpop.xlane.xlu0 %1038
    %v1040 = vmul.f32 %v1024, %v1024
    %v1041 = vmul.f32 %v1025, %v1025
    %v1042 = vmul.f32 %v1026, %v1026
    %v1043 = vmul.f32 %v1027, %v1027
    %v1044 = vsel %vm123, %v1040, 0.0
    %1045 = vadd.xlane.f32.xlu0 %v1044
    %v1046 = vpop.xlane.xlu0 %1045
    %v1047 = vsel %vm123, %v1041, 0.0
    %1048 = vadd.xlane.f32.xlu0 %v1047
    %v1049 = vpop.xlane.xlu0 %1048
    %v1050 = vsel %vm123, %v1042, 0.0
    %1051 = vadd.xlane.f32.xlu0 %v1050
    %v1052 = vpop.xlane.xlu0 %1051
    %v1053 = vsel %vm123, %v1043, 0.0
    %1054 = vadd.xlane.f32.xlu0 %v1053
    %v1055 = vpop.xlane.xlu0 %1054
    %1056 = vmatpush.msra.mxu0 0.0
    %1057 = vmatpush.msra.mxu0 0.0
    %1058 = vmatpush.msra.mxu0 0.0
    %1059 = vmatpush.msra.mxu0 0.0
    %1060 = vmatpush.msra.mxu0 0.0
    %1061 = vmatpush.msra.mxu0 0.0
    %1062 = vmatpush.msra.mxu0 0.0
    %1063 = vmatpush.msra.mxu0 0.0
    %1064 = vmatpush.msra.mxu0 0.0
    %1065 = vmatpush.msra.mxu0 0.0
    %1066 = vmatpush.msra.mxu0 0.0
    %1067 = vmatpush.msra.mxu0 0.0
    %1068 = vmatpush.msra.mxu0 %v1039
    %1069 = vmatpush.msra.mxu0 %v1036
    %1070 = vmatpush.msra.mxu0 %v1033
    %1071 = vmatpush.msra.mxu0 %v1030
    %1072 = vmatmul.f32.gmra.mxu0 %v197
    %v1073 = vpop.f32.mrf.mxu0
    %v1074 = vadd.f32 0.0, %v1073
    %1075 = vmatmul.f32.gmra.mxu0 %v200
    %v1076 = vpop.f32.mrf.mxu0
    %v1077 = vadd.f32 0.0, %v1076
    %1078 = vmatmul.f32.gmra.mxu0 %v203
    %v1079 = vpop.f32.mrf.mxu0
    %v1080 = vadd.f32 0.0, %v1079
    %1081 = vmatmul.f32.gmra.mxu0 %v206
    %v1082 = vpop.f32.mrf.mxu0
    %v1083 = vadd.f32 0.0, %v1082
    %1084 = vdwg.mxu0
    %1085 = vmatpush.msra.mxu0 0.0
    %1086 = vmatpush.msra.mxu0 0.0
    %1087 = vmatpush.msra.mxu0 0.0
    %1088 = vmatpush.msra.mxu0 0.0
    %1089 = vmatpush.msra.mxu0 0.0
    %1090 = vmatpush.msra.mxu0 0.0
    %1091 = vmatpush.msra.mxu0 0.0
    %1092 = vmatpush.msra.mxu0 0.0
    %1093 = vmatpush.msra.mxu0 0.0
    %1094 = vmatpush.msra.mxu0 0.0
    %1095 = vmatpush.msra.mxu0 0.0
    %1096 = vmatpush.msra.mxu0 0.0
    %1097 = vmatpush.msra.mxu0 %v1055
    %1098 = vmatpush.msra.mxu0 %v1052
    %1099 = vmatpush.msra.mxu0 %v1049
    %1100 = vmatpush.msra.mxu0 %v1046
    %1101 = vmatmul.f32.gmra.mxu0 %v197
    %v1102 = vpop.f32.mrf.mxu0
    %v1103 = vadd.f32 0.0, %v1102
    %1104 = vmatmul.f32.gmra.mxu0 %v200
    %v1105 = vpop.f32.mrf.mxu0
    %v1106 = vadd.f32 0.0, %v1105
    %1107 = vmatmul.f32.gmra.mxu0 %v203
    %v1108 = vpop.f32.mrf.mxu0
    %v1109 = vadd.f32 0.0, %v1108
    %1110 = vmatmul.f32.gmra.mxu0 %v206
    %v1111 = vpop.f32.mrf.mxu0
    %v1112 = vadd.f32 0.0, %v1111
    %1113 = vdwg.mxu0
    %v1114 = vmul.f32 %v1074, %v1074
    %v1115 = vmul.f32 %v1077, %v1077
    %v1116 = vmul.f32 %v1080, %v1080
    %v1117 = vmul.f32 %v1083, %v1083
    %v1118 = vsub.f32 %v1103, %v1114
    %v1119 = vsub.f32 %v1106, %v1115
    %v1120 = vsub.f32 %v1109, %v1116
    %v1121 = vsub.f32 %v1112, %v1117
    %v1122 = vadd.f32 %v1118, 1e-05
    %v1123 = vadd.f32 %v1119, 1e-05
    %v1124 = vadd.f32 %v1120, 1e-05
    %v1125 = vadd.f32 %v1121, 1e-05
    %v1126 = vrsqrt.pop %v1122
    %v1127 = vmul.f32 %v1126, %v1122
    %v1128 = vmul.f32 %v1127, %v1126
    %v1129 = vmul.f32 0.5, %v1128
    %v1130 = vsub.f32 1.5, %v1129
    %v1131 = vmul.f32 %v1126, %v1130
    %vm1132 = vweird.f32 %v1122
    %vm1133 = vweird.f32 %v1126
    %vm1134 = vmor %vm1132, %vm1133
    %v1135 = vsel %vm1134, %v1126, %v1131
    %v1136 = vrsqrt.pop %v1123
    %v1137 = vmul.f32 %v1136, %v1123
    %v1138 = vmul.f32 %v1137, %v1136
    %v1139 = vmul.f32 0.5, %v1138
    %v1140 = vsub.f32 1.5, %v1139
    %v1141 = vmul.f32 %v1136, %v1140
    %vm1142 = vweird.f32 %v1123
    %vm1143 = vweird.f32 %v1136
    %vm1144 = vmor %vm1142, %vm1143
    %v1145 = vsel %vm1144, %v1136, %v1141
    %v1146 = vrsqrt.pop %v1124
    %v1147 = vmul.f32 %v1146, %v1124
    %v1148 = vmul.f32 %v1147, %v1146
    %v1149 = vmul.f32 0.5, %v1148
    %v1150 = vsub.f32 1.5, %v1149
    %v1151 = vmul.f32 %v1146, %v1150
    %vm1152 = vweird.f32 %v1124
    %vm1153 = vweird.f32 %v1146
    %vm1154 = vmor %vm1152, %vm1153
    %v1155 = vsel %vm1154, %v1146, %v1151
    %v1156 = vrsqrt.pop %v1125
    %v1157 = vmul.f32 %v1156, %v1125
    %v1158 = vmul.f32 %v1157, %v1156
    %v1159 = vmul.f32 0.5, %v1158
    %v1160 = vsub.f32 1.5, %v1159
    %v1161 = vmul.f32 %v1156, %v1160
    %vm1162 = vweird.f32 %v1125
    %vm1163 = vweird.f32 %v1156
    %vm1164 = vmor %vm1162, %vm1163
    %v1165 = vsel %vm1164, %v1156, %v1161
    %v1166 = vmul.f32 %v65, %v1135
    %v1167 = vmul.f32 %v66, %v1145
    %v1168 = vmul.f32 %v67, %v1155
    %v1169 = vmul.f32 %v68, %v1165
    %v1170 = vmul.f32 %v1074, %v1166
    %v1171 = vmul.f32 %v1077, %v1167
    %v1172 = vmul.f32 %v1080, %v1168
    %v1173 = vmul.f32 %v1083, %v1169
    %v1174 = vsub.f32 %v69, %v1170
    %v1175 = vsub.f32 %v70, %v1171
    %v1176 = vsub.f32 %v71, %v1172
    %v1177 = vsub.f32 %v72, %v1173
    %1179 = vset.pattern.permute.xlu0 0
    %1180 = vperm.xlu0 %1179, %v1166
    %v1181 = vpop.permute.xlu0 %1180
    %1184 = vset.pattern.permute.xlu0 0
    %1185 = vperm.xlu0 %1184, %v1167
    %v1186 = vpop.permute.xlu0 %1185
    %1189 = vset.pattern.permute.xlu0 0
    %1190 = vperm.xlu0 %1189, %v1168
    %v1191 = vpop.permute.xlu0 %1190
    %1194 = vset.pattern.permute.xlu0 0
    %1195 = vperm.xlu0 %1194, %v1169
    %v1196 = vpop.permute.xlu0 %1195
    %v1198 = vmul.f32 %v947, %v1181
    %v1199 = vmul.f32 %v949, %v1186
    %v1200 = vmul.f32 %v952, %v1191
    %v1201 = vmul.f32 %v954, %v1196
    %1203 = vset.pattern.permute.xlu0 0
    %1204 = vperm.xlu0 %1203, %v1174
    %v1205 = vpop.permute.xlu0 %1204
    %1208 = vset.pattern.permute.xlu0 0
    %1209 = vperm.xlu0 %1208, %v1175
    %v1210 = vpop.permute.xlu0 %1209
    %1213 = vset.pattern.permute.xlu0 0
    %1214 = vperm.xlu0 %1213, %v1176
    %v1215 = vpop.permute.xlu0 %1214
    %1218 = vset.pattern.permute.xlu0 0
    %1219 = vperm.xlu0 %1218, %v1177
    %v1220 = vpop.permute.xlu0 %1219
    %v1222 = vadd.f32 %v1198, %v1205
    %v1223 = vadd.f32 %v1199, %v1210
    %v1224 = vadd.f32 %v1200, %v1215
    %v1225 = vadd.f32 %v1201, %v1220
    %v1226 = vand.u32 2147483647, %v1222
    %v1227 = vand.u32 2147483647, %v1223
    %v1228 = vand.u32 2147483647, %v1224
    %v1229 = vand.u32 2147483647, %v1225
    %v1230 = vsub.f32 0.0, %v1226
    %v1231 = vsub.f32 0.0, %v1227
    %v1232 = vsub.f32 0.0, %v1228
    %v1233 = vsub.f32 0.0, %v1229
    %v1234 = vmul.f32 %v1230, 1.442695
    %v1235 = vpow.pop %v1234
    %v1236 = vmul.f32 %v1231, 1.442695
    %v1237 = vpow.pop %v1236
    %v1238 = vmul.f32 %v1232, 1.442695
    %v1239 = vpow.pop %v1238
    %v1240 = vmul.f32 %v1233, 1.442695
    %v1241 = vpow.pop %v1240
    %v1242 = vadd.f32 %v1235, 2.0
    %v1243 = vadd.f32 %v1237, 2.0
    %v1244 = vadd.f32 %v1239, 2.0
    %v1245 = vadd.f32 %v1241, 2.0
    %v1246 = vmul.f32 %v1235, %v1242
    %v1247 = vmul.f32 %v1237, %v1243
    %v1248 = vmul.f32 %v1239, %v1244
    %v1249 = vmul.f32 %v1241, %v1245
    %vm1250 = vcmp.ge.f32.partialorder %v1222, 0.0
    %vm1251 = vcmp.ge.f32.partialorder %v1223, 0.0
    %vm1252 = vcmp.ge.f32.partialorder %v1224, 0.0
    %vm1253 = vcmp.ge.f32.partialorder %v1225, 0.0
    %v1254 = vmul.f32 %v1235, 2.0
    %v1255 = vmul.f32 %v1237, 2.0
    %v1256 = vmul.f32 %v1239, 2.0
    %v1257 = vmul.f32 %v1241, 2.0
    %v1258 = vadd.f32 %v1254, 1.0
    %v1259 = vadd.f32 %v1255, 1.0
    %v1260 = vadd.f32 %v1256, 1.0
    %v1261 = vadd.f32 %v1257, 1.0
    %v1262 = vsel %vm1250, %v1258, %v1246
    %v1263 = vsel %vm1251, %v1259, %v1247
    %v1264 = vsel %vm1252, %v1260, %v1248
    %v1265 = vsel %vm1253, %v1261, %v1249
    %v1266 = vmul.f32 %v1254, %v1235
    %v1267 = vmul.f32 %v1255, %v1237
    %v1268 = vmul.f32 %v1256, %v1239
    %v1269 = vmul.f32 %v1257, %v1241
    %v1270 = vadd.f32 %v1262, %v1266
    %v1271 = vadd.f32 %v1263, %v1267
    %v1272 = vadd.f32 %v1264, %v1268
    %v1273 = vadd.f32 %v1265, %v1269
    %v1274 = vadd.f32 %v1246, 2.0
    %v1275 = vadd.f32 %v1247, 2.0
    %v1276 = vadd.f32 %v1248, 2.0
    %v1277 = vadd.f32 %v1249, 2.0
    %v1278 = vsel %vm1250, %v1270, %v1274
    %v1279 = vsel %vm1251, %v1271, %v1275
    %v1280 = vsel %vm1252, %v1272, %v1276
    %v1281 = vsel %vm1253, %v1273, %v1277
    %v1282 = vmul.f32 %v1222, %v1262
    %v1283 = vmul.f32 %v1223, %v1263
    %v1284 = vmul.f32 %v1224, %v1264
    %v1285 = vmul.f32 %v1225, %v1265
    %v1286 = vrcp.pop %v1278
    %v1287 = vrcp.pop %v1279
    %v1288 = vrcp.pop %v1280
    %v1289 = vrcp.pop %v1281
    %v1290 = vmul.f32 %v1282, %v1286
    %v1291 = vmul.f32 %v1283, %v1287
    %v1292 = vmul.f32 %v1284, %v1288
    %v1293 = vmul.f32 %v1285, %v1289
    %v1294 = vadd.f32 %v1290, %v1015
    %v1295 = vadd.f32 %v1291, %v1017
    %v1296 = vadd.f32 %v1292, %v1020
    %v1297 = vadd.f32 %v1293, %v1022
    %1298 = vst.msk [vmem:[#allocation3] sm:$0xff] %vm123, %v1294
    %1299 = vst.msk [vmem:[#allocation3 + $0x8] sm:$0xff] %vm123, %v1295
    %1300 = vst.msk [vmem:[#allocation3 + $0x10] sm:$0xff] %vm123, %v1296
    %1301 = vst.msk [vmem:[#allocation3 + $0x18] sm:$0xff] %vm123, %v1297
    %v1302 = vmul.f32 %v947, %v485
    %v1303 = vmul.f32 %v949, %v485
    %v1304 = vmul.f32 %v952, %v485
    %v1305 = vmul.f32 %v954, %v485
    %1310 = vrot.lane.b32.xlu0 %v1302, 108
    %v1311 = vpop.permute.xlu0 %1310
    %1312 = vrot.lane.b32.xlu0 %v1303, 108
    %v1313 = vpop.permute.xlu0 %1312
    %1314 = vrot.lane.b32.xlu0 %v1304, 108
    %v1315 = vpop.permute.xlu0 %1314
    %1316 = vrot.lane.b32.xlu0 %v1305, 108
    %v1317 = vpop.permute.xlu0 %1316
    %v1322 = vsel %vm123, %v1311, 0.0
    %1323 = vadd.xlane.f32.xlu0 %v1322
    %v1324 = vpop.xlane.xlu0 %1323
    %v1325 = vsel %vm123, %v1313, 0.0
    %1326 = vadd.xlane.f32.xlu0 %v1325
    %v1327 = vpop.xlane.xlu0 %1326
    %v1328 = vsel %vm123, %v1315, 0.0
    %1329 = vadd.xlane.f32.xlu0 %v1328
    %v1330 = vpop.xlane.xlu0 %1329
    %v1331 = vsel %vm123, %v1317, 0.0
    %1332 = vadd.xlane.f32.xlu0 %v1331
    %v1333 = vpop.xlane.xlu0 %1332
    %v1334 = vmul.f32 %v1302, %v1302
    %v1335 = vmul.f32 %v1303, %v1303
    %v1336 = vmul.f32 %v1304, %v1304
    %v1337 = vmul.f32 %v1305, %v1305
    %1342 = vrot.lane.b32.xlu0 %v1334, 108
    %v1343 = vpop.permute.xlu0 %1342
    %1344 = vrot.lane.b32.xlu0 %v1335, 108
    %v1345 = vpop.permute.xlu0 %1344
    %1346 = vrot.lane.b32.xlu0 %v1336, 108
    %v1347 = vpop.permute.xlu0 %1346
    %1348 = vrot.lane.b32.xlu0 %v1337, 108
    %v1349 = vpop.permute.xlu0 %1348
    %v1354 = vsel %vm123, %v1343, 0.0
    %1355 = vadd.xlane.f32.xlu0 %v1354
    %v1356 = vpop.xlane.xlu0 %1355
    %v1357 = vsel %vm123, %v1345, 0.0
    %1358 = vadd.xlane.f32.xlu0 %v1357
    %v1359 = vpop.xlane.xlu0 %1358
    %v1360 = vsel %vm123, %v1347, 0.0
    %1361 = vadd.xlane.f32.xlu0 %v1360
    %v1362 = vpop.xlane.xlu0 %1361
    %v1363 = vsel %vm123, %v1349, 0.0
    %1364 = vadd.xlane.f32.xlu0 %v1363
    %v1365 = vpop.xlane.xlu0 %1364
    %1366 = vmatpush.msra.mxu0 0.0
    %1367 = vmatpush.msra.mxu0 0.0
    %1368 = vmatpush.msra.mxu0 0.0
    %1369 = vmatpush.msra.mxu0 0.0
    %1370 = vmatpush.msra.mxu0 0.0
    %1371 = vmatpush.msra.mxu0 0.0
    %1372 = vmatpush.msra.mxu0 0.0
    %1373 = vmatpush.msra.mxu0 0.0
    %1374 = vmatpush.msra.mxu0 0.0
    %1375 = vmatpush.msra.mxu0 0.0
    %1376 = vmatpush.msra.mxu0 0.0
    %1377 = vmatpush.msra.mxu0 0.0
    %1378 = vmatpush.msra.mxu0 %v1333
    %1379 = vmatpush.msra.mxu0 %v1330
    %1380 = vmatpush.msra.mxu0 %v1327
    %1381 = vmatpush.msra.mxu0 %v1324
    %1382 = vmatmul.f32.gmra.mxu0 %v197
    %v1383 = vpop.f32.mrf.mxu0
    %v1384 = vadd.f32 0.0, %v1383
    %1385 = vmatmul.f32.gmra.mxu0 %v200
    %v1386 = vpop.f32.mrf.mxu0
    %v1387 = vadd.f32 0.0, %v1386
    %1388 = vmatmul.f32.gmra.mxu0 %v203
    %v1389 = vpop.f32.mrf.mxu0
    %v1390 = vadd.f32 0.0, %v1389
    %1391 = vmatmul.f32.gmra.mxu0 %v206
    %v1392 = vpop.f32.mrf.mxu0
    %v1393 = vadd.f32 0.0, %v1392
    %1394 = vdwg.mxu0
    %1395 = vmatpush.msra.mxu0 0.0
    %1396 = vmatpush.msra.mxu0 0.0
    %1397 = vmatpush.msra.mxu0 0.0
    %1398 = vmatpush.msra.mxu0 0.0
    %1399 = vmatpush.msra.mxu0 0.0
    %1400 = vmatpush.msra.mxu0 0.0
    %1401 = vmatpush.msra.mxu0 0.0
    %1402 = vmatpush.msra.mxu0 0.0
    %1403 = vmatpush.msra.mxu0 0.0
    %1404 = vmatpush.msra.mxu0 0.0
    %1405 = vmatpush.msra.mxu0 0.0
    %1406 = vmatpush.msra.mxu0 0.0
    %1407 = vmatpush.msra.mxu0 %v1365
    %1408 = vmatpush.msra.mxu0 %v1362
    %1409 = vmatpush.msra.mxu0 %v1359
    %1410 = vmatpush.msra.mxu0 %v1356
    %1411 = vmatmul.f32.gmra.mxu0 %v197
    %v1412 = vpop.f32.mrf.mxu0
    %v1413 = vadd.f32 0.0, %v1412
    %1414 = vmatmul.f32.gmra.mxu0 %v200
    %v1415 = vpop.f32.mrf.mxu0
    %v1416 = vadd.f32 0.0, %v1415
    %1417 = vmatmul.f32.gmra.mxu0 %v203
    %v1418 = vpop.f32.mrf.mxu0
    %v1419 = vadd.f32 0.0, %v1418
    %1420 = vmatmul.f32.gmra.mxu0 %v206
    %v1421 = vpop.f32.mrf.mxu0
    %v1422 = vadd.f32 0.0, %v1421
    %1423 = vdwg.mxu0
    %v1424 = vmul.f32 %v1384, %v1384
    %v1425 = vmul.f32 %v1387, %v1387
    %v1426 = vmul.f32 %v1390, %v1390
    %v1427 = vmul.f32 %v1393, %v1393
    %v1428 = vsub.f32 %v1413, %v1424
    %v1429 = vsub.f32 %v1416, %v1425
    %v1430 = vsub.f32 %v1419, %v1426
    %v1431 = vsub.f32 %v1422, %v1427
    %v1432 = vadd.f32 %v1428, 1e-05
    %v1433 = vadd.f32 %v1429, 1e-05
    %v1434 = vadd.f32 %v1430, 1e-05
    %v1435 = vadd.f32 %v1431, 1e-05
    %v1436 = vrsqrt.pop %v1432
    %v1437 = vmul.f32 %v1436, %v1432
    %v1438 = vmul.f32 %v1437, %v1436
    %v1439 = vmul.f32 0.5, %v1438
    %v1440 = vsub.f32 1.5, %v1439
    %v1441 = vmul.f32 %v1436, %v1440
    %vm1442 = vweird.f32 %v1432
    %vm1443 = vweird.f32 %v1436
    %vm1444 = vmor %vm1442, %vm1443
    %v1445 = vsel %vm1444, %v1436, %v1441
    %v1446 = vrsqrt.pop %v1433
    %v1447 = vmul.f32 %v1446, %v1433
    %v1448 = vmul.f32 %v1447, %v1446
    %v1449 = vmul.f32 0.5, %v1448
    %v1450 = vsub.f32 1.5, %v1449
    %v1451 = vmul.f32 %v1446, %v1450
    %vm1452 = vweird.f32 %v1433
    %vm1453 = vweird.f32 %v1446
    %vm1454 = vmor %vm1452, %vm1453
    %v1455 = vsel %vm1454, %v1446, %v1451
    %v1456 = vrsqrt.pop %v1434
    %v1457 = vmul.f32 %v1456, %v1434
    %v1458 = vmul.f32 %v1457, %v1456
    %v1459 = vmul.f32 0.5, %v1458
    %v1460 = vsub.f32 1.5, %v1459
    %v1461 = vmul.f32 %v1456, %v1460
    %vm1462 = vweird.f32 %v1434
    %vm1463 = vweird.f32 %v1456
    %vm1464 = vmor %vm1462, %vm1463
    %v1465 = vsel %vm1464, %v1456, %v1461
    %v1466 = vrsqrt.pop %v1435
    %v1467 = vmul.f32 %v1466, %v1435
    %v1468 = vmul.f32 %v1467, %v1466
    %v1469 = vmul.f32 0.5, %v1468
    %v1470 = vsub.f32 1.5, %v1469
    %v1471 = vmul.f32 %v1466, %v1470
    %vm1472 = vweird.f32 %v1435
    %vm1473 = vweird.f32 %v1466
    %vm1474 = vmor %vm1472, %vm1473
    %v1475 = vsel %vm1474, %v1466, %v1471
    %v1476 = vmul.f32 %v65, %v1445
    %v1477 = vmul.f32 %v66, %v1455
    %v1478 = vmul.f32 %v67, %v1465
    %v1479 = vmul.f32 %v68, %v1475
    %v1480 = vmul.f32 %v1384, %v1476
    %v1481 = vmul.f32 %v1387, %v1477
    %v1482 = vmul.f32 %v1390, %v1478
    %v1483 = vmul.f32 %v1393, %v1479
    %v1484 = vsub.f32 %v69, %v1480
    %v1485 = vsub.f32 %v70, %v1481
    %v1486 = vsub.f32 %v71, %v1482
    %v1487 = vsub.f32 %v72, %v1483
    %1489 = vset.pattern.permute.xlu0 0
    %1490 = vperm.xlu0 %1489, %v1476
    %v1491 = vpop.permute.xlu0 %1490
    %1494 = vset.pattern.permute.xlu0 0
    %1495 = vperm.xlu0 %1494, %v1477
    %v1496 = vpop.permute.xlu0 %1495
    %1499 = vset.pattern.permute.xlu0 0
    %1500 = vperm.xlu0 %1499, %v1478
    %v1501 = vpop.permute.xlu0 %1500
    %1504 = vset.pattern.permute.xlu0 0
    %1505 = vperm.xlu0 %1504, %v1479
    %v1506 = vpop.permute.xlu0 %1505
    %v1508 = vmul.f32 %v947, %v1491
    %v1509 = vmul.f32 %v949, %v1496
    %v1510 = vmul.f32 %v952, %v1501
    %v1511 = vmul.f32 %v954, %v1506
    %1513 = vset.pattern.permute.xlu0 0
    %1514 = vperm.xlu0 %1513, %v1484
    %v1515 = vpop.permute.xlu0 %1514
    %1518 = vset.pattern.permute.xlu0 0
    %1519 = vperm.xlu0 %1518, %v1485
    %v1520 = vpop.permute.xlu0 %1519
    %1523 = vset.pattern.permute.xlu0 0
    %1524 = vperm.xlu0 %1523, %v1486
    %v1525 = vpop.permute.xlu0 %1524
    %1528 = vset.pattern.permute.xlu0 0
    %1529 = vperm.xlu0 %1528, %v1487
    %v1530 = vpop.permute.xlu0 %1529
    %v1532 = vadd.f32 %v1508, %v1515
    %v1533 = vadd.f32 %v1509, %v1520
    %v1534 = vadd.f32 %v1510, %v1525
    %v1535 = vadd.f32 %v1511, %v1530
    %v1536 = vand.u32 2147483647, %v1532
    %v1537 = vand.u32 2147483647, %v1533
    %v1538 = vand.u32 2147483647, %v1534
    %v1539 = vand.u32 2147483647, %v1535
    %v1540 = vsub.f32 0.0, %v1536
    %v1541 = vsub.f32 0.0, %v1537
    %v1542 = vsub.f32 0.0, %v1538
    %v1543 = vsub.f32 0.0, %v1539
    %v1544 = vmul.f32 %v1540, 1.442695
    %v1545 = vpow.pop %v1544
    %v1546 = vmul.f32 %v1541, 1.442695
    %v1547 = vpow.pop %v1546
    %v1548 = vmul.f32 %v1542, 1.442695
    %v1549 = vpow.pop %v1548
    %v1550 = vmul.f32 %v1543, 1.442695
    %v1551 = vpow.pop %v1550
    %v1552 = vadd.f32 %v1545, 2.0
    %v1553 = vadd.f32 %v1547, 2.0
    %v1554 = vadd.f32 %v1549, 2.0
    %v1555 = vadd.f32 %v1551, 2.0
    %v1556 = vmul.f32 %v1545, %v1552
    %v1557 = vmul.f32 %v1547, %v1553
    %v1558 = vmul.f32 %v1549, %v1554
    %v1559 = vmul.f32 %v1551, %v1555
    %vm1560 = vcmp.ge.f32.partialorder %v1532, 0.0
    %vm1561 = vcmp.ge.f32.partialorder %v1533, 0.0
    %vm1562 = vcmp.ge.f32.partialorder %v1534, 0.0
    %vm1563 = vcmp.ge.f32.partialorder %v1535, 0.0
    %v1564 = vmul.f32 %v1545, 2.0
    %v1565 = vmul.f32 %v1547, 2.0
    %v1566 = vmul.f32 %v1549, 2.0
    %v1567 = vmul.f32 %v1551, 2.0
    %v1568 = vadd.f32 %v1564, 1.0
    %v1569 = vadd.f32 %v1565, 1.0
    %v1570 = vadd.f32 %v1566, 1.0
    %v1571 = vadd.f32 %v1567, 1.0
    %v1572 = vsel %vm1560, %v1568, %v1556
    %v1573 = vsel %vm1561, %v1569, %v1557
    %v1574 = vsel %vm1562, %v1570, %v1558
    %v1575 = vsel %vm1563, %v1571, %v1559
    %v1576 = vmul.f32 %v1564, %v1545
    %v1577 = vmul.f32 %v1565, %v1547
    %v1578 = vmul.f32 %v1566, %v1549
    %v1579 = vmul.f32 %v1567, %v1551
    %v1580 = vadd.f32 %v1572, %v1576
    %v1581 = vadd.f32 %v1573, %v1577
    %v1582 = vadd.f32 %v1574, %v1578
    %v1583 = vadd.f32 %v1575, %v1579
    %v1584 = vadd.f32 %v1556, 2.0
    %v1585 = vadd.f32 %v1557, 2.0
    %v1586 = vadd.f32 %v1558, 2.0
    %v1587 = vadd.f32 %v1559, 2.0
    %v1588 = vsel %vm1560, %v1580, %v1584
    %v1589 = vsel %vm1561, %v1581, %v1585
    %v1590 = vsel %vm1562, %v1582, %v1586
    %v1591 = vsel %vm1563, %v1583, %v1587
    %v1592 = vmul.f32 %v1532, %v1572
    %v1593 = vmul.f32 %v1533, %v1573
    %v1594 = vmul.f32 %v1534, %v1574
    %v1595 = vmul.f32 %v1535, %v1575
    %v1596 = vrcp.pop %v1588
    %v1597 = vrcp.pop %v1589
    %v1598 = vrcp.pop %v1590
    %v1599 = vrcp.pop %v1591
    %v1600 = vmul.f32 %v1592, %v1596
    %v1601 = vmul.f32 %v1593, %v1597
    %v1602 = vmul.f32 %v1594, %v1598
    %v1603 = vmul.f32 %v1595, %v1599
    %v1604 = vadd.f32 %v1600, %v1015
    %v1605 = vadd.f32 %v1601, %v1017
    %v1606 = vadd.f32 %v1602, %v1020
    %v1607 = vadd.f32 %v1603, %v1022
    %vm1608 = vcmask 326816
    %1609 = vst.msk [vmem:[#allocation3] sm:$0xff] %vm1608, %v1604
    %1610 = vst.msk [vmem:[#allocation3 + $0x8] sm:$0xff] %vm1608, %v1605
    %1611 = vst.msk [vmem:[#allocation3 + $0x10] sm:$0xff] %vm1608, %v1606
    %1612 = vst.msk [vmem:[#allocation3 + $0x18] sm:$0xff] %vm1608, %v1607
    // Predicated region
    $region54: #{tpu_custom_call.1} parent=1 // pred_check
      _
    $region55: #{tpu_custom_call.1} parent=1 // pred_check_branch
      %1614 = sbr.rel (0) target = $region57
    $region56: #{tpu_custom_call.1} parent=1 // pred_region
      %1616 = vsyncadd [#allocation4], 0
      %s1617 = sshll.u32 [#allocation3], 4
      %s1618 = int_to_ptr.vmem [resolvable:$true] %s1617
      %s1619 = sshll.u32 %s13, 4
      %s1620 = int_to_ptr.hbm [resolvable:$true] %s1619
      %1625 = dma.vmem_to_hbm [thread:$0]  %s1618, 512, %s1620, [#allocation4], 128, 128, 8
    $region57: #{tpu_custom_call.1} parent=1 // pred_fallthru
      _
    // Predicated region
    $region58: #{tpu_custom_call.1} parent=1 // pred_check
      _
    $region59: #{tpu_custom_call.1} parent=1 // pred_check_branch
      %1627 = sbr.rel (0) target = $region61
    $region60: #{tpu_custom_call.1} parent=1 // pred_region
      %1629 = dma.done [#allocation4], 512
    $region61: #{tpu_custom_call.1} parent=1 // pred_fallthru
      _
    %1630 = vsyncpa [#allocation4], 1

</llo_original>
